<compile_context>
chip_gen: v7x
topology: tpu7x:2x2x1
jax: 0.10.0
libtpu: 0.0.40
codegen_flags: <defaults>
</compile_context>

<pallas_src>
import jax
import jax.numpy as jnp
import numpy as np
from jax.experimental import pallas as pl
from jax.experimental.pallas import tpu as pltpu

# ------------------------- config (small, self-consistent) -------------------
NUM_WORDS = 128      # vocabulary size V (== one lane width -> lane-dense FC)
DIM_WORD = 32        # word embedding dim (== rnn input size)
HIDDEN = 32          # hidden_size; must equal dim_embed (init_dec_state assert)
NUM_LAYERS = 1       # single-layer LSTM
BATCH = 4
SEQ_LEN = 8
SUBLANE = 8          # batch block size (one sublane tile per grid step)


# ------------------------------ fused decoder kernel -------------------------
def decoder_kernel(ids_ref, h0_ref, emb_ref, wih_ref, whh_ref, b_ref,
                   wfc_ref, bfc_ref, o_ref):
    """Fully fused decoder forward for one batch block (everything in VMEM).

    ids_ref : (T, BB, 1) int32  word ids, time-major
    h0_ref  : (BB, H)    encoder state (h0 == c0)
    emb_ref : (V, D)     embedding table
    wih_ref : (D, 4H)    W_ih^T
    whh_ref : (H, 4H)    W_hh^T
    b_ref   : (1, 4H)    b_ih + b_hh
    wfc_ref : (H, V)     W_fc^T
    bfc_ref : (1, V)     b_fc
    o_ref   : (BB, T*V)  logits, batch-major (row b = [t=0 | t=1 | ... ])
    """
    T, BB, _ = ids_ref.shape
    H = h0_ref.shape[-1]
    V, _ = emb_ref.shape

    # ---- phase 0: fused embedding gather + input projection.
    # gate_table[v] = emb[v] @ W_ih^T + bias is a per-word gate preactivation
    # table (V, 4H); the one-hot matmul performs gather + projection in a
    # single MXU pass for all T timesteps at once.
    gate_table = (jnp.dot(emb_ref[...], wih_ref[...],
                          preferred_element_type=jnp.float32)
                  + b_ref[...])                                      # (V, 4H)
    iota_v = jax.lax.broadcasted_iota(jnp.int32, (T, BB, V), 2)
    onehot = (ids_ref[...] == iota_v).astype(jnp.float32).reshape(T * BB, V)
    x_proj = jnp.dot(onehot, gate_table,
                     preferred_element_type=jnp.float32)             # (T*BB, 4H)

    whh = whh_ref[...]          # loaded once, reused across the unrolled loop
    wfc = wfc_ref[...]
    bfc = bfc_ref[...]
    h = h0_ref[...]             # init_dec_state: h0 = c0 = encoder_state
    c = h0_ref[...]

    # ---- phase 1: genuinely sequential recurrence, statically unrolled.
    # TODO(synk): for T >~ 16-32, stage x_proj in a VMEM scratch and switch to
    # lax.fori_loop(..., unroll=k) so live ranges stay within the vreg file.
    # TODO(synk): stage W_hh in the MXU (pltpu.matmul_push_rhs /
    # matmul_acc_lhs / matmul_pop) to avoid re-pushing the RHS every step.
    for t in range(T):
        gates = x_proj[t * BB:(t + 1) * BB, :] + jnp.dot(
            h, whh, preferred_element_type=jnp.float32)              # (BB, 4H)
        # Two full-128-lane transcendentals (EUP slot, full lane occupancy)
        # followed by cheap lane extracts, instead of four 32-lane sub-vreg
        # sigmoids/tanh on the serial chain.
        sig = jax.nn.sigmoid(gates)
        th = jnp.tanh(gates)
        # PyTorch LSTM gate order: (i, f, g, o).
        # TODO(synk): at production H (>=128) keep gate boundaries 128-lane
        # aligned so these extracts become whole-vreg moves.
        i_g = sig[:, 0:H]
        f_g = sig[:, H:2 * H]
        g_g = th[:, 2 * H:3 * H]
        o_g = sig[:, 3 * H:4 * H]
        c = f_g * c + i_g * g_g
        h = o_g * jnp.tanh(c)
        # Fused FC: one full lane-dense (8,128) tile store per timestep; no
        # partial-lane hidden-state scratch and no separate FC pass.
        o_ref[:, t * V:(t + 1) * V] = (
            jnp.dot(h, wfc, preferred_element_type=jnp.float32) + bfc)


def fused_decoder_call(ids_tb1, h0, emb, w_ih_t, w_hh_t, bias, w_fc_t, b_fc):
    T, Bp, _ = ids_tb1.shape
    _, H = h0.shape
    V, D = emb.shape
    BB = SUBLANE
    nb = Bp // BB                                      # batch blocks (>=1)
    return pl.pallas_call(
        decoder_kernel,
        out_shape=jax.ShapeDtypeStruct((Bp, T * V), jnp.float32),
        grid_spec=pltpu.PrefetchScalarGridSpec(
            num_scalar_prefetch=0,
            grid=(nb,),                                # batch-parallel axis
            in_specs=[
                pl.BlockSpec((T, BB, 1), lambda i: (0, i, 0)),   # word ids
                pl.BlockSpec((BB, H), lambda i: (i, 0)),         # encoder_state
                pl.BlockSpec((V, D), lambda i: (0, 0)),          # embedding
                pl.BlockSpec((D, 4 * H), lambda i: (0, 0)),      # W_ih^T
                pl.BlockSpec((H, 4 * H), lambda i: (0, 0)),      # W_hh^T
                pl.BlockSpec((1, 4 * H), lambda i: (0, 0)),      # b_ih + b_hh
                pl.BlockSpec((H, V), lambda i: (0, 0)),          # W_fc^T
                pl.BlockSpec((1, V), lambda i: (0, 0)),          # b_fc
            ],
            out_specs=pl.BlockSpec((BB, T * V), lambda i: (i, 0)),
        ),
        compiler_params=pltpu.CompilerParams(
            dimension_semantics=("parallel",)),        # splits across TCs on v7x
    )(ids_tb1, h0, emb, w_ih_t, w_hh_t, bias, w_fc_t, b_fc)


# ------------------------------ decoder forward -------------------------------
@jax.jit
def decoder_forward(params, inputs, encoder_state):
    """inputs: (B, T) int32 word ids, encoder_state: (B, H) float32.
    Returns logits: (B*T, NUM_WORDS) (batch-major flatten, as in PyTorch)."""
    B, T = inputs.shape
    V = params["embedding"].shape[0]
    Bp = ((B + SUBLANE - 1) // SUBLANE) * SUBLANE
    pad = Bp - B
    ids = jnp.pad(inputs, ((0, pad), (0, 0)))            # (Bp, T), pad = word 0
    ids_tb1 = ids.T[:, :, None]                          # (T, Bp, 1) int plumbing
    h0 = jnp.pad(encoder_state, ((0, pad), (0, 0)))      # (Bp, H)
    # dropout == identity (eval mode)

    logits_pad = fused_decoder_call(ids_tb1, h0, params["embedding"],
                                    params["w_ih_t"], params["w_hh_t"],
                                    params["bias"],
                                    params["w_fc_t"], params["b_fc"])  # (Bp, T*V)
    # free reshape: row b of (B, T*V) is [t=0 | t=1 | ...] -> (B*T, V) batch-major
    return logits_pad[:B].reshape(B * T, V)


# ------------------------------ pure-JAX reference ----------------------------
def ref_forward(params, inputs, encoder_state):
    embeds = jnp.take(params["embedding"], inputs, axis=0)      # (B, T, D)
    x_tbd = jnp.transpose(embeds, (1, 0, 2))                    # (T, B, D)

    def step(carry, x_t):
        h, c = carry
        gates = x_t @ params["w_ih_t"] + h @ params["w_hh_t"] + params["bias"]
        H = HIDDEN
        i = jax.nn.sigmoid(gates[:, 0:H])
        f = jax.nn.sigmoid(gates[:, H:2 * H])
        g = jnp.tanh(gates[:, 2 * H:3 * H])
        o = jax.nn.sigmoid(gates[:, 3 * H:4 * H])
        c_new = f * c + i * g
        h_new = o * jnp.tanh(c_new)
        return (h_new, c_new), h_new

    (_, _), outs_tbh = jax.lax.scan(step, (encoder_state, encoder_state), x_tbd)
    outs = jnp.transpose(outs_tbh, (1, 0, 2)).reshape(-1, HIDDEN)
    return outs @ params["w_fc_t"] + params["b_fc"]


# ------------------------------ parameter init --------------------------------
def make_params(key):
    k0, k1, k2, k3, k4 = jax.random.split(key, 5)
    # TODO(synk): PyTorch uses nn.init.orthogonal_ for LSTM weights; a scaled
    # normal init is used here (deterministic, synthetic) — forward semantics
    # are identical, only the numbers differ.
    emb = jax.random.normal(k0, (NUM_WORDS, DIM_WORD), jnp.float32) * 0.1
    w_ih = jax.random.normal(k1, (4 * HIDDEN, DIM_WORD), jnp.float32) * 0.1
    w_hh = jax.random.normal(k2, (4 * HIDDEN, HIDDEN), jnp.float32) * 0.1
    # init_rnn_weights: bias_ih = 0 with forget-gate slice set to 1, bias_hh = 0
    b_ih = jnp.zeros((4 * HIDDEN,), jnp.float32).at[HIDDEN:2 * HIDDEN].set(1.0)
    b_hh = jnp.zeros((4 * HIDDEN,), jnp.float32)
    w_fc = jax.random.normal(k3, (NUM_WORDS, HIDDEN), jnp.float32) * 0.1
    b_fc = jax.random.normal(k4, (NUM_WORDS,), jnp.float32) * 0.01
    return {
        "embedding": emb,
        "w_ih_t": w_ih.T,                      # (D, 4H)
        "w_hh_t": w_hh.T,                      # (H, 4H)
        "bias": (b_ih + b_hh)[None, :],        # (1, 4H)
        "w_fc_t": w_fc.T,                      # (H, V)
        "b_fc": b_fc[None, :],                 # (1, V)
    }


if __name__ == "__main__":
    key = jax.random.PRNGKey(0)
    kp, ki, ke = jax.random.split(key, 3)

    params = make_params(kp)
    inputs = jax.random.randint(ki, (BATCH, SEQ_LEN), 0, NUM_WORDS, jnp.int32)
    encoder_state = jax.random.normal(ke, (BATCH, HIDDEN), jnp.float32)

    logits = decoder_forward(params, inputs, encoder_state)
    logits = jax.block_until_ready(logits)

    assert logits.shape == (BATCH * SEQ_LEN, NUM_WORDS)

    ref = jax.block_until_ready(ref_forward(params, inputs, encoder_state))
    np.testing.assert_allclose(np.asarray(logits), np.asarray(ref),
                               rtol=1e-4, atol=1e-4)
    print("KERNEL_OK")
</pallas_src>

<mosaic_0001>
module attributes {stable_mosaic.version = 11 : i64} {
  func.func @decoder_kernel(%arg0: i32, %arg1: memref<8x8x1xi32, #tpu.memory_space<vmem>>, %arg2: memref<8x32xf32, #tpu.memory_space<vmem>>, %arg3: memref<128x32xf32, #tpu.memory_space<vmem>>, %arg4: memref<32x128xf32, #tpu.memory_space<vmem>>, %arg5: memref<32x128xf32, #tpu.memory_space<vmem>>, %arg6: memref<1x128xf32, #tpu.memory_space<vmem>>, %arg7: memref<32x128xf32, #tpu.memory_space<vmem>>, %arg8: memref<1x128xf32, #tpu.memory_space<vmem>>, %arg9: memref<8x1024xf32, #tpu.memory_space<vmem>>) attributes {dimension_semantics = [#tpu.dimension_semantics<parallel>], iteration_bounds = array<i64: 1>, scalar_prefetch = 0 : i64, scratch_operands = 0 : i64, tpu.core_type = #tpu.core_type<tc>, window_params = [{transform_indices = @transform_0, window_bounds = array<i64: 8, 8, 1>}, {transform_indices = @transform_1, window_bounds = array<i64: 8, 32>}, {pipeline_mode = #tpu.pipeline_mode<synchronous>, transform_indices = @transform_2, window_bounds = array<i64: 128, 32>}, {pipeline_mode = #tpu.pipeline_mode<synchronous>, transform_indices = @transform_3, window_bounds = array<i64: 32, 128>}, {pipeline_mode = #tpu.pipeline_mode<synchronous>, transform_indices = @transform_4, window_bounds = array<i64: 32, 128>}, {pipeline_mode = #tpu.pipeline_mode<synchronous>, transform_indices = @transform_5, window_bounds = array<i64: 1, 128>}, {pipeline_mode = #tpu.pipeline_mode<synchronous>, transform_indices = @transform_6, window_bounds = array<i64: 32, 128>}, {pipeline_mode = #tpu.pipeline_mode<synchronous>, transform_indices = @transform_7, window_bounds = array<i64: 1, 128>}, {transform_indices = @transform_8, window_bounds = array<i64: 8, 1024>}]} {
    %c0 = arith.constant 0 : index
    %c0_0 = arith.constant 0 : index
    %0 = vector.load %arg3[%c0, %c0_0] : memref<128x32xf32, #tpu.memory_space<vmem>>, vector<128x32xf32>
    %c0_1 = arith.constant 0 : index
    %c0_2 = arith.constant 0 : index
    %1 = vector.load %arg4[%c0_1, %c0_2] : memref<32x128xf32, #tpu.memory_space<vmem>>, vector<32x128xf32>
    %cst = arith.constant dense<0.000000e+00> : vector<128x128xf32>
    %2 = tpu.matmul %0, %1, %cst {dimension_numbers = #tpu.dot_dimension_numbers<[1], [0], [0], [1], [0, 0, 1, 1], [], []>} : vector<128x32xf32>, vector<32x128xf32>, vector<128x128xf32> -> vector<128x128xf32>
    %c0_3 = arith.constant 0 : index
    %c0_4 = arith.constant 0 : index
    %3 = vector.load %arg6[%c0_3, %c0_4] : memref<1x128xf32, #tpu.memory_space<vmem>>, vector<1x128xf32>
    %4 = vector.broadcast %3 : vector<1x128xf32> to vector<128x128xf32>
    %5 = arith.addf %2, %4 : vector<128x128xf32>
    %6 = tpu.iota {dimensions = array<i32: 2>} : vector<8x8x128xi32>
    %c0_5 = arith.constant 0 : index
    %c0_6 = arith.constant 0 : index
    %c0_7 = arith.constant 0 : index
    %7 = vector.load %arg1[%c0_5, %c0_6, %c0_7] : memref<8x8x1xi32, #tpu.memory_space<vmem>>, vector<8x8x1xi32>
    %8 = vector.broadcast %7 : vector<8x8x1xi32> to vector<8x8x128xi32>
    %9 = arith.cmpi eq, %8, %6 : vector<8x8x128xi32>
    %10 = arith.extui %9 : vector<8x8x128xi1> to vector<8x8x128xi32>
    %11 = arith.sitofp %10 : vector<8x8x128xi32> to vector<8x8x128xf32>
    %12 = vector.shape_cast %11 : vector<8x8x128xf32> to vector<64x128xf32>
    %cst_8 = arith.constant dense<0.000000e+00> : vector<64x128xf32>
    %13 = tpu.matmul %12, %5, %cst_8 {dimension_numbers = #tpu.dot_dimension_numbers<[1], [0], [0], [1], [0, 0, 1, 1], [], []>} : vector<64x128xf32>, vector<128x128xf32>, vector<64x128xf32> -> vector<64x128xf32>
    %c0_9 = arith.constant 0 : index
    %c0_10 = arith.constant 0 : index
    %14 = vector.load %arg5[%c0_9, %c0_10] : memref<32x128xf32, #tpu.memory_space<vmem>>, vector<32x128xf32>
    %c0_11 = arith.constant 0 : index
    %c0_12 = arith.constant 0 : index
    %15 = vector.load %arg7[%c0_11, %c0_12] : memref<32x128xf32, #tpu.memory_space<vmem>>, vector<32x128xf32>
    %c0_13 = arith.constant 0 : index
    %c0_14 = arith.constant 0 : index
    %16 = vector.load %arg8[%c0_13, %c0_14] : memref<1x128xf32, #tpu.memory_space<vmem>>, vector<1x128xf32>
    %c0_15 = arith.constant 0 : index
    %c0_16 = arith.constant 0 : index
    %17 = vector.load %arg2[%c0_15, %c0_16] : memref<8x32xf32, #tpu.memory_space<vmem>>, vector<8x32xf32>
    %c0_17 = arith.constant 0 : index
    %c0_18 = arith.constant 0 : index
    %18 = vector.load %arg2[%c0_17, %c0_18] : memref<8x32xf32, #tpu.memory_space<vmem>>, vector<8x32xf32>
    %19 = vector.extract_strided_slice %13 {offsets = [0, 0], sizes = [8, 128], strides = [1, 1]} : vector<64x128xf32> to vector<8x128xf32>
    %cst_19 = arith.constant dense<0.000000e+00> : vector<8x128xf32>
    %20 = tpu.matmul %17, %14, %cst_19 {dimension_numbers = #tpu.dot_dimension_numbers<[1], [0], [0], [1], [0, 0, 1, 1], [], []>} : vector<8x32xf32>, vector<32x128xf32>, vector<8x128xf32> -> vector<8x128xf32>
    %21 = arith.addf %19, %20 : vector<8x128xf32>
    %22 = arith.negf %21 : vector<8x128xf32>
    %23 = math.exp %22 : vector<8x128xf32>
    %cst_20 = arith.constant 1.000000e+00 : f32
    %24 = vector.broadcast %cst_20 : f32 to vector<8x128xf32>
    %25 = arith.addf %24, %23 : vector<8x128xf32>
    %26 = arith.divf %24, %25 : vector<8x128xf32>
    %27 = math.tanh %21 : vector<8x128xf32>
    %28 = vector.extract_strided_slice %26 {offsets = [0, 0], sizes = [8, 32], strides = [1, 1]} : vector<8x128xf32> to vector<8x32xf32>
    %29 = vector.extract_strided_slice %26 {offsets = [0, 32], sizes = [8, 32], strides = [1, 1]} : vector<8x128xf32> to vector<8x32xf32>
    %30 = vector.extract_strided_slice %27 {offsets = [0, 64], sizes = [8, 32], strides = [1, 1]} : vector<8x128xf32> to vector<8x32xf32>
    %31 = vector.extract_strided_slice %26 {offsets = [0, 96], sizes = [8, 32], strides = [1, 1]} : vector<8x128xf32> to vector<8x32xf32>
    %32 = arith.mulf %29, %18 : vector<8x32xf32>
    %33 = arith.mulf %28, %30 : vector<8x32xf32>
    %34 = arith.addf %32, %33 : vector<8x32xf32>
    %35 = math.tanh %34 : vector<8x32xf32>
    %36 = arith.mulf %31, %35 : vector<8x32xf32>
    %cst_21 = arith.constant dense<0.000000e+00> : vector<8x128xf32>
    %37 = tpu.matmul %36, %15, %cst_21 {dimension_numbers = #tpu.dot_dimension_numbers<[1], [0], [0], [1], [0, 0, 1, 1], [], []>} : vector<8x32xf32>, vector<32x128xf32>, vector<8x128xf32> -> vector<8x128xf32>
    %38 = vector.broadcast %16 : vector<1x128xf32> to vector<8x128xf32>
    %39 = arith.addf %37, %38 : vector<8x128xf32>
    %c0_22 = arith.constant 0 : index
    %c0_23 = arith.constant 0 : index
    %40 = vector.load %arg9[%c0_22, %c0_23] : memref<8x1024xf32, #tpu.memory_space<vmem>>, vector<8x128xf32>
    tpu.vector_store %arg9[%c0_22, %c0_23], %39 {strides = array<i32>} : memref<8x1024xf32, #tpu.memory_space<vmem>>, vector<8x128xf32>,
    %41 = vector.extract_strided_slice %13 {offsets = [8, 0], sizes = [8, 128], strides = [1, 1]} : vector<64x128xf32> to vector<8x128xf32>
    %cst_24 = arith.constant dense<0.000000e+00> : vector<8x128xf32>
    %42 = tpu.matmul %36, %14, %cst_24 {dimension_numbers = #tpu.dot_dimension_numbers<[1], [0], [0], [1], [0, 0, 1, 1], [], []>} : vector<8x32xf32>, vector<32x128xf32>, vector<8x128xf32> -> vector<8x128xf32>
    %43 = arith.addf %41, %42 : vector<8x128xf32>
    %44 = arith.negf %43 : vector<8x128xf32>
    %45 = math.exp %44 : vector<8x128xf32>
    %cst_25 = arith.constant 1.000000e+00 : f32
    %46 = vector.broadcast %cst_25 : f32 to vector<8x128xf32>
    %47 = arith.addf %46, %45 : vector<8x128xf32>
    %48 = arith.divf %46, %47 : vector<8x128xf32>
    %49 = math.tanh %43 : vector<8x128xf32>
    %50 = vector.extract_strided_slice %48 {offsets = [0, 0], sizes = [8, 32], strides = [1, 1]} : vector<8x128xf32> to vector<8x32xf32>
    %51 = vector.extract_strided_slice %48 {offsets = [0, 32], sizes = [8, 32], strides = [1, 1]} : vector<8x128xf32> to vector<8x32xf32>
    %52 = vector.extract_strided_slice %49 {offsets = [0, 64], sizes = [8, 32], strides = [1, 1]} : vector<8x128xf32> to vector<8x32xf32>
    %53 = vector.extract_strided_slice %48 {offsets = [0, 96], sizes = [8, 32], strides = [1, 1]} : vector<8x128xf32> to vector<8x32xf32>
    %54 = arith.mulf %51, %34 : vector<8x32xf32>
    %55 = arith.mulf %50, %52 : vector<8x32xf32>
    %56 = arith.addf %54, %55 : vector<8x32xf32>
    %57 = math.tanh %56 : vector<8x32xf32>
    %58 = arith.mulf %53, %57 : vector<8x32xf32>
    %cst_26 = arith.constant dense<0.000000e+00> : vector<8x128xf32>
    %59 = tpu.matmul %58, %15, %cst_26 {dimension_numbers = #tpu.dot_dimension_numbers<[1], [0], [0], [1], [0, 0, 1, 1], [], []>} : vector<8x32xf32>, vector<32x128xf32>, vector<8x128xf32> -> vector<8x128xf32>
    %60 = vector.broadcast %16 : vector<1x128xf32> to vector<8x128xf32>
    %61 = arith.addf %59, %60 : vector<8x128xf32>
    %c0_27 = arith.constant 0 : index
    %c128 = arith.constant 128 : index
    %62 = vector.load %arg9[%c0_27, %c128] : memref<8x1024xf32, #tpu.memory_space<vmem>>, vector<8x128xf32>
    tpu.vector_store %arg9[%c0_27, %c128], %61 {strides = array<i32>} : memref<8x1024xf32, #tpu.memory_space<vmem>>, vector<8x128xf32>,
    %63 = vector.extract_strided_slice %13 {offsets = [16, 0], sizes = [8, 128], strides = [1, 1]} : vector<64x128xf32> to vector<8x128xf32>
    %cst_28 = arith.constant dense<0.000000e+00> : vector<8x128xf32>
    %64 = tpu.matmul %58, %14, %cst_28 {dimension_numbers = #tpu.dot_dimension_numbers<[1], [0], [0], [1], [0, 0, 1, 1], [], []>} : vector<8x32xf32>, vector<32x128xf32>, vector<8x128xf32> -> vector<8x128xf32>
    %65 = arith.addf %63, %64 : vector<8x128xf32>
    %66 = arith.negf %65 : vector<8x128xf32>
    %67 = math.exp %66 : vector<8x128xf32>
    %cst_29 = arith.constant 1.000000e+00 : f32
    %68 = vector.broadcast %cst_29 : f32 to vector<8x128xf32>
    %69 = arith.addf %68, %67 : vector<8x128xf32>
    %70 = arith.divf %68, %69 : vector<8x128xf32>
    %71 = math.tanh %65 : vector<8x128xf32>
    %72 = vector.extract_strided_slice %70 {offsets = [0, 0], sizes = [8, 32], strides = [1, 1]} : vector<8x128xf32> to vector<8x32xf32>
    %73 = vector.extract_strided_slice %70 {offsets = [0, 32], sizes = [8, 32], strides = [1, 1]} : vector<8x128xf32> to vector<8x32xf32>
    %74 = vector.extract_strided_slice %71 {offsets = [0, 64], sizes = [8, 32], strides = [1, 1]} : vector<8x128xf32> to vector<8x32xf32>
    %75 = vector.extract_strided_slice %70 {offsets = [0, 96], sizes = [8, 32], strides = [1, 1]} : vector<8x128xf32> to vector<8x32xf32>
    %76 = arith.mulf %73, %56 : vector<8x32xf32>
    %77 = arith.mulf %72, %74 : vector<8x32xf32>
    %78 = arith.addf %76, %77 : vector<8x32xf32>
    %79 = math.tanh %78 : vector<8x32xf32>
    %80 = arith.mulf %75, %79 : vector<8x32xf32>
    %cst_30 = arith.constant dense<0.000000e+00> : vector<8x128xf32>
    %81 = tpu.matmul %80, %15, %cst_30 {dimension_numbers = #tpu.dot_dimension_numbers<[1], [0], [0], [1], [0, 0, 1, 1], [], []>} : vector<8x32xf32>, vector<32x128xf32>, vector<8x128xf32> -> vector<8x128xf32>
    %82 = vector.broadcast %16 : vector<1x128xf32> to vector<8x128xf32>
    %83 = arith.addf %81, %82 : vector<8x128xf32>
    %c0_31 = arith.constant 0 : index
    %c256 = arith.constant 256 : index
    %84 = vector.load %arg9[%c0_31, %c256] : memref<8x1024xf32, #tpu.memory_space<vmem>>, vector<8x128xf32>
    tpu.vector_store %arg9[%c0_31, %c256], %83 {strides = array<i32>} : memref<8x1024xf32, #tpu.memory_space<vmem>>, vector<8x128xf32>,
    %85 = vector.extract_strided_slice %13 {offsets = [24, 0], sizes = [8, 128], strides = [1, 1]} : vector<64x128xf32> to vector<8x128xf32>
    %cst_32 = arith.constant dense<0.000000e+00> : vector<8x128xf32>
    %86 = tpu.matmul %80, %14, %cst_32 {dimension_numbers = #tpu.dot_dimension_numbers<[1], [0], [0], [1], [0, 0, 1, 1], [], []>} : vector<8x32xf32>, vector<32x128xf32>, vector<8x128xf32> -> vector<8x128xf32>
    %87 = arith.addf %85, %86 : vector<8x128xf32>
    %88 = arith.negf %87 : vector<8x128xf32>
    %89 = math.exp %88 : vector<8x128xf32>
    %cst_33 = arith.constant 1.000000e+00 : f32
    %90 = vector.broadcast %cst_33 : f32 to vector<8x128xf32>
    %91 = arith.addf %90, %89 : vector<8x128xf32>
    %92 = arith.divf %90, %91 : vector<8x128xf32>
    %93 = math.tanh %87 : vector<8x128xf32>
    %94 = vector.extract_strided_slice %92 {offsets = [0, 0], sizes = [8, 32], strides = [1, 1]} : vector<8x128xf32> to vector<8x32xf32>
    %95 = vector.extract_strided_slice %92 {offsets = [0, 32], sizes = [8, 32], strides = [1, 1]} : vector<8x128xf32> to vector<8x32xf32>
    %96 = vector.extract_strided_slice %93 {offsets = [0, 64], sizes = [8, 32], strides = [1, 1]} : vector<8x128xf32> to vector<8x32xf32>
    %97 = vector.extract_strided_slice %92 {offsets = [0, 96], sizes = [8, 32], strides = [1, 1]} : vector<8x128xf32> to vector<8x32xf32>
    %98 = arith.mulf %95, %78 : vector<8x32xf32>
    %99 = arith.mulf %94, %96 : vector<8x32xf32>
    %100 = arith.addf %98, %99 : vector<8x32xf32>
    %101 = math.tanh %100 : vector<8x32xf32>
    %102 = arith.mulf %97, %101 : vector<8x32xf32>
    %cst_34 = arith.constant dense<0.000000e+00> : vector<8x128xf32>
    %103 = tpu.matmul %102, %15, %cst_34 {dimension_numbers = #tpu.dot_dimension_numbers<[1], [0], [0], [1], [0, 0, 1, 1], [], []>} : vector<8x32xf32>, vector<32x128xf32>, vector<8x128xf32> -> vector<8x128xf32>
    %104 = vector.broadcast %16 : vector<1x128xf32> to vector<8x128xf32>
    %105 = arith.addf %103, %104 : vector<8x128xf32>
    %c0_35 = arith.constant 0 : index
    %c384 = arith.constant 384 : index
    %106 = vector.load %arg9[%c0_35, %c384] : memref<8x1024xf32, #tpu.memory_space<vmem>>, vector<8x128xf32>
    tpu.vector_store %arg9[%c0_35, %c384], %105 {strides = array<i32>} : memref<8x1024xf32, #tpu.memory_space<vmem>>, vector<8x128xf32>,
    %107 = vector.extract_strided_slice %13 {offsets = [32, 0], sizes = [8, 128], strides = [1, 1]} : vector<64x128xf32> to vector<8x128xf32>
    %cst_36 = arith.constant dense<0.000000e+00> : vector<8x128xf32>
    %108 = tpu.matmul %102, %14, %cst_36 {dimension_numbers = #tpu.dot_dimension_numbers<[1], [0], [0], [1], [0, 0, 1, 1], [], []>} : vector<8x32xf32>, vector<32x128xf32>, vector<8x128xf32> -> vector<8x128xf32>
    %109 = arith.addf %107, %108 : vector<8x128xf32>
    %110 = arith.negf %109 : vector<8x128xf32>
    %111 = math.exp %110 : vector<8x128xf32>
    %cst_37 = arith.constant 1.000000e+00 : f32
    %112 = vector.broadcast %cst_37 : f32 to vector<8x128xf32>
    %113 = arith.addf %112, %111 : vector<8x128xf32>
    %114 = arith.divf %112, %113 : vector<8x128xf32>
    %115 = math.tanh %109 : vector<8x128xf32>
    %116 = vector.extract_strided_slice %114 {offsets = [0, 0], sizes = [8, 32], strides = [1, 1]} : vector<8x128xf32> to vector<8x32xf32>
    %117 = vector.extract_strided_slice %114 {offsets = [0, 32], sizes = [8, 32], strides = [1, 1]} : vector<8x128xf32> to vector<8x32xf32>
    %118 = vector.extract_strided_slice %115 {offsets = [0, 64], sizes = [8, 32], strides = [1, 1]} : vector<8x128xf32> to vector<8x32xf32>
    %119 = vector.extract_strided_slice %114 {offsets = [0, 96], sizes = [8, 32], strides = [1, 1]} : vector<8x128xf32> to vector<8x32xf32>
    %120 = arith.mulf %117, %100 : vector<8x32xf32>
    %121 = arith.mulf %116, %118 : vector<8x32xf32>
    %122 = arith.addf %120, %121 : vector<8x32xf32>
    %123 = math.tanh %122 : vector<8x32xf32>
    %124 = arith.mulf %119, %123 : vector<8x32xf32>
    %cst_38 = arith.constant dense<0.000000e+00> : vector<8x128xf32>
    %125 = tpu.matmul %124, %15, %cst_38 {dimension_numbers = #tpu.dot_dimension_numbers<[1], [0], [0], [1], [0, 0, 1, 1], [], []>} : vector<8x32xf32>, vector<32x128xf32>, vector<8x128xf32> -> vector<8x128xf32>
    %126 = vector.broadcast %16 : vector<1x128xf32> to vector<8x128xf32>
    %127 = arith.addf %125, %126 : vector<8x128xf32>
    %c0_39 = arith.constant 0 : index
    %c512 = arith.constant 512 : index
    %128 = vector.load %arg9[%c0_39, %c512] : memref<8x1024xf32, #tpu.memory_space<vmem>>, vector<8x128xf32>
    tpu.vector_store %arg9[%c0_39, %c512], %127 {strides = array<i32>} : memref<8x1024xf32, #tpu.memory_space<vmem>>, vector<8x128xf32>,
    %129 = vector.extract_strided_slice %13 {offsets = [40, 0], sizes = [8, 128], strides = [1, 1]} : vector<64x128xf32> to vector<8x128xf32>
    %cst_40 = arith.constant dense<0.000000e+00> : vector<8x128xf32>
    %130 = tpu.matmul %124, %14, %cst_40 {dimension_numbers = #tpu.dot_dimension_numbers<[1], [0], [0], [1], [0, 0, 1, 1], [], []>} : vector<8x32xf32>, vector<32x128xf32>, vector<8x128xf32> -> vector<8x128xf32>
    %131 = arith.addf %129, %130 : vector<8x128xf32>
    %132 = arith.negf %131 : vector<8x128xf32>
    %133 = math.exp %132 : vector<8x128xf32>
    %cst_41 = arith.constant 1.000000e+00 : f32
    %134 = vector.broadcast %cst_41 : f32 to vector<8x128xf32>
    %135 = arith.addf %134, %133 : vector<8x128xf32>
    %136 = arith.divf %134, %135 : vector<8x128xf32>
    %137 = math.tanh %131 : vector<8x128xf32>
    %138 = vector.extract_strided_slice %136 {offsets = [0, 0], sizes = [8, 32], strides = [1, 1]} : vector<8x128xf32> to vector<8x32xf32>
    %139 = vector.extract_strided_slice %136 {offsets = [0, 32], sizes = [8, 32], strides = [1, 1]} : vector<8x128xf32> to vector<8x32xf32>
    %140 = vector.extract_strided_slice %137 {offsets = [0, 64], sizes = [8, 32], strides = [1, 1]} : vector<8x128xf32> to vector<8x32xf32>
    %141 = vector.extract_strided_slice %136 {offsets = [0, 96], sizes = [8, 32], strides = [1, 1]} : vector<8x128xf32> to vector<8x32xf32>
    %142 = arith.mulf %139, %122 : vector<8x32xf32>
    %143 = arith.mulf %138, %140 : vector<8x32xf32>
    %144 = arith.addf %142, %143 : vector<8x32xf32>
    %145 = math.tanh %144 : vector<8x32xf32>
    %146 = arith.mulf %141, %145 : vector<8x32xf32>
    %cst_42 = arith.constant dense<0.000000e+00> : vector<8x128xf32>
    %147 = tpu.matmul %146, %15, %cst_42 {dimension_numbers = #tpu.dot_dimension_numbers<[1], [0], [0], [1], [0, 0, 1, 1], [], []>} : vector<8x32xf32>, vector<32x128xf32>, vector<8x128xf32> -> vector<8x128xf32>
    %148 = vector.broadcast %16 : vector<1x128xf32> to vector<8x128xf32>
    %149 = arith.addf %147, %148 : vector<8x128xf32>
    %c0_43 = arith.constant 0 : index
    %c640 = arith.constant 640 : index
    %150 = vector.load %arg9[%c0_43, %c640] : memref<8x1024xf32, #tpu.memory_space<vmem>>, vector<8x128xf32>
    tpu.vector_store %arg9[%c0_43, %c640], %149 {strides = array<i32>} : memref<8x1024xf32, #tpu.memory_space<vmem>>, vector<8x128xf32>,
    %151 = vector.extract_strided_slice %13 {offsets = [48, 0], sizes = [8, 128], strides = [1, 1]} : vector<64x128xf32> to vector<8x128xf32>
    %cst_44 = arith.constant dense<0.000000e+00> : vector<8x128xf32>
    %152 = tpu.matmul %146, %14, %cst_44 {dimension_numbers = #tpu.dot_dimension_numbers<[1], [0], [0], [1], [0, 0, 1, 1], [], []>} : vector<8x32xf32>, vector<32x128xf32>, vector<8x128xf32> -> vector<8x128xf32>
    %153 = arith.addf %151, %152 : vector<8x128xf32>
    %154 = arith.negf %153 : vector<8x128xf32>
    %155 = math.exp %154 : vector<8x128xf32>
    %cst_45 = arith.constant 1.000000e+00 : f32
    %156 = vector.broadcast %cst_45 : f32 to vector<8x128xf32>
    %157 = arith.addf %156, %155 : vector<8x128xf32>
    %158 = arith.divf %156, %157 : vector<8x128xf32>
    %159 = math.tanh %153 : vector<8x128xf32>
    %160 = vector.extract_strided_slice %158 {offsets = [0, 0], sizes = [8, 32], strides = [1, 1]} : vector<8x128xf32> to vector<8x32xf32>
    %161 = vector.extract_strided_slice %158 {offsets = [0, 32], sizes = [8, 32], strides = [1, 1]} : vector<8x128xf32> to vector<8x32xf32>
    %162 = vector.extract_strided_slice %159 {offsets = [0, 64], sizes = [8, 32], strides = [1, 1]} : vector<8x128xf32> to vector<8x32xf32>
    %163 = vector.extract_strided_slice %158 {offsets = [0, 96], sizes = [8, 32], strides = [1, 1]} : vector<8x128xf32> to vector<8x32xf32>
    %164 = arith.mulf %161, %144 : vector<8x32xf32>
    %165 = arith.mulf %160, %162 : vector<8x32xf32>
    %166 = arith.addf %164, %165 : vector<8x32xf32>
    %167 = math.tanh %166 : vector<8x32xf32>
    %168 = arith.mulf %163, %167 : vector<8x32xf32>
    %cst_46 = arith.constant dense<0.000000e+00> : vector<8x128xf32>
    %169 = tpu.matmul %168, %15, %cst_46 {dimension_numbers = #tpu.dot_dimension_numbers<[1], [0], [0], [1], [0, 0, 1, 1], [], []>} : vector<8x32xf32>, vector<32x128xf32>, vector<8x128xf32> -> vector<8x128xf32>
    %170 = vector.broadcast %16 : vector<1x128xf32> to vector<8x128xf32>
    %171 = arith.addf %169, %170 : vector<8x128xf32>
    %c0_47 = arith.constant 0 : index
    %c768 = arith.constant 768 : index
    %172 = vector.load %arg9[%c0_47, %c768] : memref<8x1024xf32, #tpu.memory_space<vmem>>, vector<8x128xf32>
    tpu.vector_store %arg9[%c0_47, %c768], %171 {strides = array<i32>} : memref<8x1024xf32, #tpu.memory_space<vmem>>, vector<8x128xf32>,
    %173 = vector.extract_strided_slice %13 {offsets = [56, 0], sizes = [8, 128], strides = [1, 1]} : vector<64x128xf32> to vector<8x128xf32>
    %cst_48 = arith.constant dense<0.000000e+00> : vector<8x128xf32>
    %174 = tpu.matmul %168, %14, %cst_48 {dimension_numbers = #tpu.dot_dimension_numbers<[1], [0], [0], [1], [0, 0, 1, 1], [], []>} : vector<8x32xf32>, vector<32x128xf32>, vector<8x128xf32> -> vector<8x128xf32>
    %175 = arith.addf %173, %174 : vector<8x128xf32>
    %176 = arith.negf %175 : vector<8x128xf32>
    %177 = math.exp %176 : vector<8x128xf32>
    %cst_49 = arith.constant 1.000000e+00 : f32
    %178 = vector.broadcast %cst_49 : f32 to vector<8x128xf32>
    %179 = arith.addf %178, %177 : vector<8x128xf32>
    %180 = arith.divf %178, %179 : vector<8x128xf32>
    %181 = math.tanh %175 : vector<8x128xf32>
    %182 = vector.extract_strided_slice %180 {offsets = [0, 0], sizes = [8, 32], strides = [1, 1]} : vector<8x128xf32> to vector<8x32xf32>
    %183 = vector.extract_strided_slice %180 {offsets = [0, 32], sizes = [8, 32], strides = [1, 1]} : vector<8x128xf32> to vector<8x32xf32>
    %184 = vector.extract_strided_slice %181 {offsets = [0, 64], sizes = [8, 32], strides = [1, 1]} : vector<8x128xf32> to vector<8x32xf32>
    %185 = vector.extract_strided_slice %180 {offsets = [0, 96], sizes = [8, 32], strides = [1, 1]} : vector<8x128xf32> to vector<8x32xf32>
    %186 = arith.mulf %183, %166 : vector<8x32xf32>
    %187 = arith.mulf %182, %184 : vector<8x32xf32>
    %188 = arith.addf %186, %187 : vector<8x32xf32>
    %189 = math.tanh %188 : vector<8x32xf32>
    %190 = arith.mulf %185, %189 : vector<8x32xf32>
    %cst_50 = arith.constant dense<0.000000e+00> : vector<8x128xf32>
    %191 = tpu.matmul %190, %15, %cst_50 {dimension_numbers = #tpu.dot_dimension_numbers<[1], [0], [0], [1], [0, 0, 1, 1], [], []>} : vector<8x32xf32>, vector<32x128xf32>, vector<8x128xf32> -> vector<8x128xf32>
    %192 = vector.broadcast %16 : vector<1x128xf32> to vector<8x128xf32>
    %193 = arith.addf %191, %192 : vector<8x128xf32>
    %c0_51 = arith.constant 0 : index
    %c896 = arith.constant 896 : index
    %194 = vector.load %arg9[%c0_51, %c896] : memref<8x1024xf32, #tpu.memory_space<vmem>>, vector<8x128xf32>
    tpu.vector_store %arg9[%c0_51, %c896], %193 {strides = array<i32>} : memref<8x1024xf32, #tpu.memory_space<vmem>>, vector<8x128xf32>,
    return
  }
  func.func @transform_0(%arg0: i32) -> (i32, i32, i32) {
    %c0_i32 = arith.constant 0 : i32
    %c0_i32_0 = arith.constant 0 : i32
    %c0_i32_1 = arith.constant 0 : i32
    return %c0_i32, %arg0, %c0_i32_0 : i32, i32, i32
  }
  func.func @transform_1(%arg0: i32) -> (i32, i32) {
    %c0_i32 = arith.constant 0 : i32
    %c0_i32_0 = arith.constant 0 : i32
    return %arg0, %c0_i32 : i32, i32
  }
  func.func @transform_2(%arg0: i32) -> (i32, i32) {
    %c0_i32 = arith.constant 0 : i32
    %c0_i32_0 = arith.constant 0 : i32
    %c0_i32_1 = arith.constant 0 : i32
    return %c0_i32, %c0_i32_0 : i32, i32
  }
  func.func @transform_3(%arg0: i32) -> (i32, i32) {
    %c0_i32 = arith.constant 0 : i32
    %c0_i32_0 = arith.constant 0 : i32
    %c0_i32_1 = arith.constant 0 : i32
    return %c0_i32, %c0_i32_0 : i32, i32
  }
  func.func @transform_4(%arg0: i32) -> (i32, i32) {
    %c0_i32 = arith.constant 0 : i32
    %c0_i32_0 = arith.constant 0 : i32
    %c0_i32_1 = arith.constant 0 : i32
    return %c0_i32, %c0_i32_0 : i32, i32
  }
  func.func @transform_5(%arg0: i32) -> (i32, i32) {
    %c0_i32 = arith.constant 0 : i32
    %c0_i32_0 = arith.constant 0 : i32
    %c0_i32_1 = arith.constant 0 : i32
    return %c0_i32, %c0_i32_0 : i32, i32
  }
  func.func @transform_6(%arg0: i32) -> (i32, i32) {
    %c0_i32 = arith.constant 0 : i32
    %c0_i32_0 = arith.constant 0 : i32
    %c0_i32_1 = arith.constant 0 : i32
    return %c0_i32, %c0_i32_0 : i32, i32
  }
  func.func @transform_7(%arg0: i32) -> (i32, i32) {
    %c0_i32 = arith.constant 0 : i32
    %c0_i32_0 = arith.constant 0 : i32
    %c0_i32_1 = arith.constant 0 : i32
    return %c0_i32, %c0_i32_0 : i32, i32
  }
  func.func @transform_8(%arg0: i32) -> (i32, i32) {
    %c0_i32 = arith.constant 0 : i32
    %c0_i32_0 = arith.constant 0 : i32
    return %arg0, %c0_i32 : i32, i32
  }
}

</mosaic_0001>

<llo_original>
// kernel: decoder_forward.1
$region0: #{decoder_forward.1}
  #allocation0 [shape = 'u32[]', space=smem, size = 0x4, offset = 0x4, fixed_abs, tag = 'smem constant byte address 0x4 - core index']
  #allocation1 [shape = 'u32[144,128]{1,0:T(1,128)}', space=vmem, size = 0x12000, scoped, tag = 'internal scratch']
  %s0 = inlined_call_operand.vmem [shape: s32[8,8,1], index: 0, kind: input, shape index: {}]
  %s1 = inlined_call_operand.vmem [shape: f32[8,32], index: 1, kind: input, shape index: {}]
  %s2 = inlined_call_operand.vmem [shape: f32[128,32], index: 2, kind: input, shape index: {}]
  %s3 = inlined_call_operand.vmem [shape: f32[32,128], index: 3, kind: input, shape index: {}]
  %s4 = inlined_call_operand.vmem [shape: f32[32,128], index: 4, kind: input, shape index: {}]
  %s5 = inlined_call_operand.vmem [shape: f32[1,128], index: 5, kind: input, shape index: {}]
  %s6 = inlined_call_operand.vmem [shape: f32[32,128], index: 6, kind: input, shape index: {}]
  %s7 = inlined_call_operand.vmem [shape: f32[1,128], index: 7, kind: input, shape index: {}]
  %s8 = inlined_call_operand.vmem [shape: f32[8,1024], index: 8, kind: output, shape index: {}]
  %s9 = sld [smem:[#allocation0]]
  $region42: #{decoder_forward.1} parent=0
    _
  %s11 = ssub.s32 1, %s9
  %s12 = scalar_select 0, %s11, %s9
  // Predicated region
  $region2: #{decoder_forward.1} parent=0 // pred_check
    _
  $region3: #{decoder_forward.1} parent=0 // pred_check_branch
    %14 = sbr.rel (0) target = $region5
  $region4: #{decoder_forward.1} parent=0 // pred_region
    _
  $region5: #{decoder_forward.1} parent=0 // pred_fallthru
    _
  // Predicated region
  $region6: #{decoder_forward.1} parent=0 // pred_check
    _
  $region7: #{decoder_forward.1} parent=0 // pred_check_branch
    %16 = sbr.rel (0) target = $region9
  $region8: #{decoder_forward.1} parent=0 // pred_region
    _
  $region9: #{decoder_forward.1} parent=0 // pred_fallthru
    _
  // Predicated region
  $region10: #{decoder_forward.1} parent=0 // pred_check
    _
  $region11: #{decoder_forward.1} parent=0 // pred_check_branch
    %18 = sbr.rel (0) target = $region13
  $region12: #{decoder_forward.1} parent=0 // pred_region
    _
  $region13: #{decoder_forward.1} parent=0 // pred_fallthru
    _
  // Predicated region
  $region14: #{decoder_forward.1} parent=0 // pred_check
    _
  $region15: #{decoder_forward.1} parent=0 // pred_check_branch
    %20 = sbr.rel (0) target = $region17
  $region16: #{decoder_forward.1} parent=0 // pred_region
    _
  $region17: #{decoder_forward.1} parent=0 // pred_fallthru
    _
  // Predicated region
  $region18: #{decoder_forward.1} parent=0 // pred_check
    _
  $region19: #{decoder_forward.1} parent=0 // pred_check_branch
    %22 = sbr.rel (0) target = $region21
  $region20: #{decoder_forward.1} parent=0 // pred_region
    _
  $region21: #{decoder_forward.1} parent=0 // pred_fallthru
    _
  // Predicated region
  $region22: #{decoder_forward.1} parent=0 // pred_check
    _
  $region23: #{decoder_forward.1} parent=0 // pred_check_branch
    %24 = sbr.rel (0) target = $region25
  $region24: #{decoder_forward.1} parent=0 // pred_region
    _
  $region25: #{decoder_forward.1} parent=0 // pred_fallthru
    _
  // Predicated region
  $region26: #{decoder_forward.1} parent=0 // pred_check
    _
  $region27: #{decoder_forward.1} parent=0 // pred_check_branch
    %26 = sbr.rel (0) target = $region29
  $region28: #{decoder_forward.1} parent=0 // pred_region
    _
  $region29: #{decoder_forward.1} parent=0 // pred_fallthru
    _
  // Predicated region
  $region30: #{decoder_forward.1} parent=0 // pred_check
    _
  $region31: #{decoder_forward.1} parent=0 // pred_check_branch
    %28 = sbr.rel (0) target = $region33
  $region32: #{decoder_forward.1} parent=0 // pred_region
    _
  $region33: #{decoder_forward.1} parent=0 // pred_fallthru
    _
  %v29 = vld [vmem:[%s2] sm:$0xff]
  %v30 = vld [vmem:[%s2 + $0x8] sm:$0xff]
  %v31 = vld [vmem:[%s2 + $0x10] sm:$0xff]
  %v32 = vld [vmem:[%s2 + $0x18] sm:$0xff]
  %v33 = vld [vmem:[%s2 + $0x20] sm:$0xff]
  %v34 = vld [vmem:[%s2 + $0x28] sm:$0xff]
  %v35 = vld [vmem:[%s2 + $0x30] sm:$0xff]
  %v36 = vld [vmem:[%s2 + $0x38] sm:$0xff]
  %v37 = vld [vmem:[%s2 + $0x40] sm:$0xff]
  %v38 = vld [vmem:[%s2 + $0x48] sm:$0xff]
  %v39 = vld [vmem:[%s2 + $0x50] sm:$0xff]
  %v40 = vld [vmem:[%s2 + $0x58] sm:$0xff]
  %v41 = vld [vmem:[%s2 + $0x60] sm:$0xff]
  %v42 = vld [vmem:[%s2 + $0x68] sm:$0xff]
  %v43 = vld [vmem:[%s2 + $0x70] sm:$0xff]
  %v44 = vld [vmem:[%s2 + $0x78] sm:$0xff]
  %v45 = vld [vmem:[%s3] sm:$0xff]
  %v46 = vld [vmem:[%s3 + $0x8] sm:$0xff]
  %v47 = vld [vmem:[%s3 + $0x10] sm:$0xff]
  %v48 = vld [vmem:[%s3 + $0x18] sm:$0xff]
  %v49 = vld [vmem:[%s5] sm:$0x1]
  %v51 = vlaneseq
  %v52 = vshrl.u32 %v51, 7
  %v53 = vsub.s32 0, %v52
  %v54 = vrot.slane %v49, %v53
  %vm56 = vcmask 261120
  %v58 = vsel %vm56, %v29, 0
  %v61 = vsel %vm56, %v30, 0
  %v64 = vsel %vm56, %v31, 0
  %v67 = vsel %vm56, %v32, 0
  %v70 = vsel %vm56, %v33, 0
  %v73 = vsel %vm56, %v34, 0
  %v76 = vsel %vm56, %v35, 0
  %v79 = vsel %vm56, %v36, 0
  %v82 = vsel %vm56, %v37, 0
  %v85 = vsel %vm56, %v38, 0
  %v88 = vsel %vm56, %v39, 0
  %v91 = vsel %vm56, %v40, 0
  %v94 = vsel %vm56, %v41, 0
  %v97 = vsel %vm56, %v42, 0
  %v100 = vsel %vm56, %v43, 0
  %v103 = vsel %vm56, %v44, 0
  %105 = vmatprep.subr.mxu0 0.0
  %106 = vmatpush1.msra.mxu0 %v45
  %107 = vmatprep.subr.mxu0 0.0
  %108 = vmatpush1.msra.mxu0 %v46
  %109 = vmatprep.subr.mxu0 0.0
  %110 = vmatpush1.msra.mxu0 %v47
  %111 = vmatprep.subr.mxu0 0.0
  %112 = vmatpush1.msra.mxu0 %v48
  %113 = vmatprep.subr.mxu0 0.0
  %114 = vmatpush1.msra.mxu0 0.0
  %115 = vmatprep.subr.mxu0 0.0
  %116 = vmatpush1.msra.mxu0 0.0
  %117 = vmatprep.subr.mxu0 0.0
  %118 = vmatpush1.msra.mxu0 0.0
  %119 = vmatprep.subr.mxu0 0.0
  %120 = vmatpush1.msra.mxu0 0.0
  %121 = vmatprep.subr.mxu0 0.0
  %122 = vmatpush1.msra.mxu0 0.0
  %123 = vmatprep.subr.mxu0 0.0
  %124 = vmatpush1.msra.mxu0 0.0
  %125 = vmatprep.subr.mxu0 0.0
  %126 = vmatpush1.msra.mxu0 0.0
  %127 = vmatprep.subr.mxu0 0.0
  %128 = vmatpush1.msra.mxu0 0.0
  %129 = vmatprep.subr.mxu0 0.0
  %130 = vmatpush1.msra.mxu0 0.0
  %131 = vmatprep.subr.mxu0 0.0
  %132 = vmatpush1.msra.mxu0 0.0
  %133 = vmatprep.subr.mxu0 0.0
  %134 = vmatpush1.msra.mxu0 0.0
  %135 = vmatprep.subr.mxu0 0.0
  %136 = vmatpush1.msra.mxu0 0.0
  %137 = vmatprep.subr.mxu0 0.0
  %138 = vmatpush1.msra.mxu0 0.0
  %139 = vmatprep.subr.mxu0 0.0
  %140 = vmatpush1.msra.mxu0 0.0
  %141 = vmatprep.subr.mxu0 0.0
  %142 = vmatpush1.msra.mxu0 0.0
  %143 = vmatprep.subr.mxu0 0.0
  %144 = vmatpush1.msra.mxu0 0.0
  %145 = vmatprep.subr.mxu0 0.0
  %146 = vmatpush1.msra.mxu0 0.0
  %147 = vmatprep.subr.mxu0 0.0
  %148 = vmatpush1.msra.mxu0 0.0
  %149 = vmatprep.subr.mxu0 0.0
  %150 = vmatpush1.msra.mxu0 0.0
  %151 = vmatprep.subr.mxu0 0.0
  %152 = vmatpush1.msra.mxu0 0.0
  %153 = vmatprep.subr.mxu0 0.0
  %154 = vmatpush1.msra.mxu0 0.0
  %155 = vmatprep.subr.mxu0 0.0
  %156 = vmatpush1.msra.mxu0 0.0
  %157 = vmatprep.subr.mxu0 0.0
  %158 = vmatpush1.msra.mxu0 0.0
  %159 = vmatprep.subr.mxu0 0.0
  %160 = vmatpush1.msra.mxu0 0.0
  %161 = vmatprep.subr.mxu0 0.0
  %162 = vmatpush1.msra.mxu0 0.0
  %163 = vmatprep.subr.mxu0 0.0
  %164 = vmatpush1.msra.mxu0 0.0
  %165 = vmatprep.subr.mxu0 0.0
  %166 = vmatpush1.msra.mxu0 0.0
  %167 = vmatprep.subr.mxu0 0.0
  %168 = vmatpush1.msra.mxu0 0.0
  %169 = vmatprep.mubr.f32.mxu0 0.0
  %170 = vmatmul.mubr.f32.gmra.mrb[0].mxu0 %v58
  %v171 = vpop.f32.mrb[0].mxu0
  %v172 = vadd.f32 %v54, %v171
  %v173 = vpop.f32.mrb[0].mxu0
  %174 = vmatprep.mubr.f32.mxu0 0.0
  %175 = vmatmul.mubr.f32.gmra.mrb[0].mxu0 %v61
  %v176 = vpop.f32.mrb[0].mxu0
  %v177 = vadd.f32 %v54, %v176
  %v178 = vpop.f32.mrb[0].mxu0
  %179 = vmatprep.mubr.f32.mxu0 0.0
  %180 = vmatmul.mubr.f32.gmra.mrb[0].mxu0 %v64
  %v181 = vpop.f32.mrb[0].mxu0
  %v182 = vadd.f32 %v54, %v181
  %v183 = vpop.f32.mrb[0].mxu0
  %184 = vmatprep.mubr.f32.mxu0 0.0
  %185 = vmatmul.mubr.f32.gmra.mrb[0].mxu0 %v67
  %v186 = vpop.f32.mrb[0].mxu0
  %v187 = vadd.f32 %v54, %v186
  %v188 = vpop.f32.mrb[0].mxu0
  %189 = vmatprep.mubr.f32.mxu0 0.0
  %190 = vmatmul.mubr.f32.gmra.mrb[0].mxu0 %v70
  %v191 = vpop.f32.mrb[0].mxu0
  %v192 = vadd.f32 %v54, %v191
  %v193 = vpop.f32.mrb[0].mxu0
  %194 = vmatprep.mubr.f32.mxu0 0.0
  %195 = vmatmul.mubr.f32.gmra.mrb[0].mxu0 %v73
  %v196 = vpop.f32.mrb[0].mxu0
  %v197 = vadd.f32 %v54, %v196
  %v198 = vpop.f32.mrb[0].mxu0
  %199 = vmatprep.mubr.f32.mxu0 0.0
  %200 = vmatmul.mubr.f32.gmra.mrb[0].mxu0 %v76
  %v201 = vpop.f32.mrb[0].mxu0
  %v202 = vadd.f32 %v54, %v201
  %v203 = vpop.f32.mrb[0].mxu0
  %204 = vmatprep.mubr.f32.mxu0 0.0
  %205 = vmatmul.mubr.f32.gmra.mrb[0].mxu0 %v79
  %v206 = vpop.f32.mrb[0].mxu0
  %v207 = vadd.f32 %v54, %v206
  %v208 = vpop.f32.mrb[0].mxu0
  %209 = vmatprep.mubr.f32.mxu0 0.0
  %210 = vmatmul.mubr.f32.gmra.mrb[0].mxu0 %v82
  %v211 = vpop.f32.mrb[0].mxu0
  %v212 = vadd.f32 %v54, %v211
  %v213 = vpop.f32.mrb[0].mxu0
  %214 = vmatprep.mubr.f32.mxu0 0.0
  %215 = vmatmul.mubr.f32.gmra.mrb[0].mxu0 %v85
  %v216 = vpop.f32.mrb[0].mxu0
  %v217 = vadd.f32 %v54, %v216
  %v218 = vpop.f32.mrb[0].mxu0
  %219 = vmatprep.mubr.f32.mxu0 0.0
  %220 = vmatmul.mubr.f32.gmra.mrb[0].mxu0 %v88
  %v221 = vpop.f32.mrb[0].mxu0
  %v222 = vadd.f32 %v54, %v221
  %v223 = vpop.f32.mrb[0].mxu0
  %224 = vmatprep.mubr.f32.mxu0 0.0
  %225 = vmatmul.mubr.f32.gmra.mrb[0].mxu0 %v91
  %v226 = vpop.f32.mrb[0].mxu0
  %v227 = vadd.f32 %v54, %v226
  %v228 = vpop.f32.mrb[0].mxu0
  %229 = vmatprep.mubr.f32.mxu0 0.0
  %230 = vmatmul.mubr.f32.gmra.mrb[0].mxu0 %v94
  %v231 = vpop.f32.mrb[0].mxu0
  %v232 = vadd.f32 %v54, %v231
  %v233 = vpop.f32.mrb[0].mxu0
  %234 = vmatprep.mubr.f32.mxu0 0.0
  %235 = vmatmul.mubr.f32.gmra.mrb[0].mxu0 %v97
  %v236 = vpop.f32.mrb[0].mxu0
  %v237 = vadd.f32 %v54, %v236
  %v238 = vpop.f32.mrb[0].mxu0
  %239 = vmatprep.mubr.f32.mxu0 0.0
  %240 = vmatmul.mubr.f32.gmra.mrb[0].mxu0 %v100
  %v241 = vpop.f32.mrb[0].mxu0
  %v242 = vadd.f32 %v54, %v241
  %v243 = vpop.f32.mrb[0].mxu0
  %244 = vmatprep.mubr.f32.mxu0 0.0
  %245 = vmatmul.mubr.f32.gmra.mrb[0].mxu0 %v103
  %v246 = vpop.f32.mrb[0].mxu0
  %v247 = vadd.f32 %v54, %v246
  %v248 = vpop.f32.mrb[0].mxu0
  %249 = vdwg.mxu0
  %v250 = vlaneseq
  %v251 = vand.u32 %v250, 127
  %v252 = vld [vmem:[%s0] sm:$0xff]
  %v253 = vld [vmem:[%s0 + $0x8] sm:$0xff]
  %v254 = vld [vmem:[%s0 + $0x10] sm:$0xff]
  %v255 = vld [vmem:[%s0 + $0x18] sm:$0xff]
  %v256 = vld [vmem:[%s0 + $0x20] sm:$0xff]
  %v257 = vld [vmem:[%s0 + $0x28] sm:$0xff]
  %v258 = vld [vmem:[%s0 + $0x30] sm:$0xff]
  %v259 = vld [vmem:[%s0 + $0x38] sm:$0xff]
  %260 = vset.pattern.permute.xlu0 0
  %261 = vperm.xlu0 %260, %v252
  %v262 = vpop.permute.xlu0 %261
  %263 = vset.pattern.permute.xlu0 0
  %264 = vperm.xlu0 %263, %v253
  %v265 = vpop.permute.xlu0 %264
  %266 = vset.pattern.permute.xlu0 0
  %267 = vperm.xlu0 %266, %v254
  %v268 = vpop.permute.xlu0 %267
  %269 = vset.pattern.permute.xlu0 0
  %270 = vperm.xlu0 %269, %v255
  %v271 = vpop.permute.xlu0 %270
  %272 = vset.pattern.permute.xlu0 0
  %273 = vperm.xlu0 %272, %v256
  %v274 = vpop.permute.xlu0 %273
  %275 = vset.pattern.permute.xlu0 0
  %276 = vperm.xlu0 %275, %v257
  %v277 = vpop.permute.xlu0 %276
  %278 = vset.pattern.permute.xlu0 0
  %279 = vperm.xlu0 %278, %v258
  %v280 = vpop.permute.xlu0 %279
  %281 = vset.pattern.permute.xlu0 0
  %282 = vperm.xlu0 %281, %v259
  %v283 = vpop.permute.xlu0 %282
  %vm284 = vcmp.eq.s32.totalorder %v262, %v251
  %vm285 = vcmp.eq.s32.totalorder %v265, %v251
  %vm286 = vcmp.eq.s32.totalorder %v268, %v251
  %vm287 = vcmp.eq.s32.totalorder %v271, %v251
  %vm288 = vcmp.eq.s32.totalorder %v274, %v251
  %vm289 = vcmp.eq.s32.totalorder %v277, %v251
  %vm290 = vcmp.eq.s32.totalorder %v280, %v251
  %vm291 = vcmp.eq.s32.totalorder %v283, %v251
  %v292 = vsel %vm284, 1, 0
  %v293 = vsel %vm285, 1, 0
  %v294 = vsel %vm286, 1, 0
  %v295 = vsel %vm287, 1, 0
  %v296 = vsel %vm288, 1, 0
  %v297 = vsel %vm289, 1, 0
  %v298 = vsel %vm290, 1, 0
  %v299 = vsel %vm291, 1, 0
  %v300 = vcvt.s32.f32 %v292
  %v301 = vcvt.s32.f32 %v293
  %v302 = vcvt.s32.f32 %v294
  %v303 = vcvt.s32.f32 %v295
  %v304 = vcvt.s32.f32 %v296
  %v305 = vcvt.s32.f32 %v297
  %v306 = vcvt.s32.f32 %v298
  %v307 = vcvt.s32.f32 %v299
  %308 = vmatprep.subr.mxu0 0.0
  %309 = vmatpush1.msra.mxu0 %v172
  %310 = vmatprep.subr.mxu0 0.0
  %311 = vmatpush1.msra.mxu0 %v177
  %312 = vmatprep.subr.mxu0 0.0
  %313 = vmatpush1.msra.mxu0 %v182
  %314 = vmatprep.subr.mxu0 0.0
  %315 = vmatpush1.msra.mxu0 %v187
  %316 = vmatprep.subr.mxu0 0.0
  %317 = vmatpush1.msra.mxu0 %v192
  %318 = vmatprep.subr.mxu0 0.0
  %319 = vmatpush1.msra.mxu0 %v197
  %320 = vmatprep.subr.mxu0 0.0
  %321 = vmatpush1.msra.mxu0 %v202
  %322 = vmatprep.subr.mxu0 0.0
  %323 = vmatpush1.msra.mxu0 %v207
  %324 = vmatprep.subr.mxu0 0.0
  %325 = vmatpush1.msra.mxu0 %v212
  %326 = vmatprep.subr.mxu0 0.0
  %327 = vmatpush1.msra.mxu0 %v217
  %328 = vmatprep.subr.mxu0 0.0
  %329 = vmatpush1.msra.mxu0 %v222
  %330 = vmatprep.subr.mxu0 0.0
  %331 = vmatpush1.msra.mxu0 %v227
  %332 = vmatprep.subr.mxu0 0.0
  %333 = vmatpush1.msra.mxu0 %v232
  %334 = vmatprep.subr.mxu0 0.0
  %335 = vmatpush1.msra.mxu0 %v237
  %336 = vmatprep.subr.mxu0 0.0
  %337 = vmatpush1.msra.mxu0 %v242
  %338 = vmatprep.subr.mxu0 0.0
  %339 = vmatpush1.msra.mxu0 %v247
  %340 = vmatprep.subr.mxu0 0.0
  %341 = vmatpush1.msra.mxu0 0.0
  %342 = vmatprep.subr.mxu0 0.0
  %343 = vmatpush1.msra.mxu0 0.0
  %344 = vmatprep.subr.mxu0 0.0
  %345 = vmatpush1.msra.mxu0 0.0
  %346 = vmatprep.subr.mxu0 0.0
  %347 = vmatpush1.msra.mxu0 0.0
  %348 = vmatprep.subr.mxu0 0.0
  %349 = vmatpush1.msra.mxu0 0.0
  %350 = vmatprep.subr.mxu0 0.0
  %351 = vmatpush1.msra.mxu0 0.0
  %352 = vmatprep.subr.mxu0 0.0
  %353 = vmatpush1.msra.mxu0 0.0
  %354 = vmatprep.subr.mxu0 0.0
  %355 = vmatpush1.msra.mxu0 0.0
  %356 = vmatprep.subr.mxu0 0.0
  %357 = vmatpush1.msra.mxu0 0.0
  %358 = vmatprep.subr.mxu0 0.0
  %359 = vmatpush1.msra.mxu0 0.0
  %360 = vmatprep.subr.mxu0 0.0
  %361 = vmatpush1.msra.mxu0 0.0
  %362 = vmatprep.subr.mxu0 0.0
  %363 = vmatpush1.msra.mxu0 0.0
  %364 = vmatprep.subr.mxu0 0.0
  %365 = vmatpush1.msra.mxu0 0.0
  %366 = vmatprep.subr.mxu0 0.0
  %367 = vmatpush1.msra.mxu0 0.0
  %368 = vmatprep.subr.mxu0 0.0
  %369 = vmatpush1.msra.mxu0 0.0
  %370 = vmatprep.subr.mxu0 0.0
  %371 = vmatpush1.msra.mxu0 0.0
  %372 = vmatprep.mubr.f32.mxu0 0.0
  %373 = vmatmul.mubr.f32.gmra.mrb[0].mxu0 %v300
  %v374 = vpop.f32.mrb[0].mxu0
  %v375 = vadd.f32 0.0, %v374
  %v376 = vpop.f32.mrb[0].mxu0
  %377 = vmatprep.mubr.f32.mxu0 0.0
  %378 = vmatmul.mubr.f32.gmra.mrb[0].mxu0 %v301
  %v379 = vpop.f32.mrb[0].mxu0
  %v380 = vadd.f32 0.0, %v379
  %v381 = vpop.f32.mrb[0].mxu0
  %382 = vmatprep.mubr.f32.mxu0 0.0
  %383 = vmatmul.mubr.f32.gmra.mrb[0].mxu0 %v302
  %v384 = vpop.f32.mrb[0].mxu0
  %v385 = vadd.f32 0.0, %v384
  %v386 = vpop.f32.mrb[0].mxu0
  %387 = vmatprep.mubr.f32.mxu0 0.0
  %388 = vmatmul.mubr.f32.gmra.mrb[0].mxu0 %v303
  %v389 = vpop.f32.mrb[0].mxu0
  %v390 = vadd.f32 0.0, %v389
  %v391 = vpop.f32.mrb[0].mxu0
  %392 = vmatprep.mubr.f32.mxu0 0.0
  %393 = vmatmul.mubr.f32.gmra.mrb[0].mxu0 %v304
  %v394 = vpop.f32.mrb[0].mxu0
  %v395 = vadd.f32 0.0, %v394
  %v396 = vpop.f32.mrb[0].mxu0
  %397 = vmatprep.mubr.f32.mxu0 0.0
  %398 = vmatmul.mubr.f32.gmra.mrb[0].mxu0 %v305
  %v399 = vpop.f32.mrb[0].mxu0
  %v400 = vadd.f32 0.0, %v399
  %v401 = vpop.f32.mrb[0].mxu0
  %402 = vmatprep.mubr.f32.mxu0 0.0
  %403 = vmatmul.mubr.f32.gmra.mrb[0].mxu0 %v306
  %v404 = vpop.f32.mrb[0].mxu0
  %v405 = vadd.f32 0.0, %v404
  %v406 = vpop.f32.mrb[0].mxu0
  %407 = vmatprep.mubr.f32.mxu0 0.0
  %408 = vmatmul.mubr.f32.gmra.mrb[0].mxu0 %v307
  %v409 = vpop.f32.mrb[0].mxu0
  %v410 = vadd.f32 0.0, %v409
  %v411 = vpop.f32.mrb[0].mxu0
  %412 = vdwg.mxu0
  %v413 = vld [vmem:[%s4] sm:$0xff]
  %v414 = vld [vmem:[%s4 + $0x8] sm:$0xff]
  %v415 = vld [vmem:[%s4 + $0x10] sm:$0xff]
  %v416 = vld [vmem:[%s4 + $0x18] sm:$0xff]
  %v417 = vld [vmem:[%s6] sm:$0xff]
  %v418 = vld [vmem:[%s6 + $0x8] sm:$0xff]
  %v419 = vld [vmem:[%s6 + $0x10] sm:$0xff]
  %v420 = vld [vmem:[%s6 + $0x18] sm:$0xff]
  %v421 = vld [vmem:[%s7] sm:$0x1]
  %v422 = vld [vmem:[%s1] sm:$0xff]
  %v424 = vsel %vm56, %v422, 0
  %426 = vmatprep.subr.mxu0 0.0
  %427 = vmatpush1.msra.mxu0 %v413
  %428 = vmatprep.subr.mxu0 0.0
  %429 = vmatpush1.msra.mxu0 %v414
  %430 = vmatprep.subr.mxu0 0.0
  %431 = vmatpush1.msra.mxu0 %v415
  %432 = vmatprep.subr.mxu0 0.0
  %433 = vmatpush1.msra.mxu0 %v416
  %434 = vmatprep.subr.mxu0 0.0
  %435 = vmatpush1.msra.mxu0 0.0
  %436 = vmatprep.subr.mxu0 0.0
  %437 = vmatpush1.msra.mxu0 0.0
  %438 = vmatprep.subr.mxu0 0.0
  %439 = vmatpush1.msra.mxu0 0.0
  %440 = vmatprep.subr.mxu0 0.0
  %441 = vmatpush1.msra.mxu0 0.0
  %442 = vmatprep.subr.mxu0 0.0
  %443 = vmatpush1.msra.mxu0 0.0
  %444 = vmatprep.subr.mxu0 0.0
  %445 = vmatpush1.msra.mxu0 0.0
  %446 = vmatprep.subr.mxu0 0.0
  %447 = vmatpush1.msra.mxu0 0.0
  %448 = vmatprep.subr.mxu0 0.0
  %449 = vmatpush1.msra.mxu0 0.0
  %450 = vmatprep.subr.mxu0 0.0
  %451 = vmatpush1.msra.mxu0 0.0
  %452 = vmatprep.subr.mxu0 0.0
  %453 = vmatpush1.msra.mxu0 0.0
  %454 = vmatprep.subr.mxu0 0.0
  %455 = vmatpush1.msra.mxu0 0.0
  %456 = vmatprep.subr.mxu0 0.0
  %457 = vmatpush1.msra.mxu0 0.0
  %458 = vmatprep.subr.mxu0 0.0
  %459 = vmatpush1.msra.mxu0 0.0
  %460 = vmatprep.subr.mxu0 0.0
  %461 = vmatpush1.msra.mxu0 0.0
  %462 = vmatprep.subr.mxu0 0.0
  %463 = vmatpush1.msra.mxu0 0.0
  %464 = vmatprep.subr.mxu0 0.0
  %465 = vmatpush1.msra.mxu0 0.0
  %466 = vmatprep.subr.mxu0 0.0
  %467 = vmatpush1.msra.mxu0 0.0
  %468 = vmatprep.subr.mxu0 0.0
  %469 = vmatpush1.msra.mxu0 0.0
  %470 = vmatprep.subr.mxu0 0.0
  %471 = vmatpush1.msra.mxu0 0.0
  %472 = vmatprep.subr.mxu0 0.0
  %473 = vmatpush1.msra.mxu0 0.0
  %474 = vmatprep.subr.mxu0 0.0
  %475 = vmatpush1.msra.mxu0 0.0
  %476 = vmatprep.subr.mxu0 0.0
  %477 = vmatpush1.msra.mxu0 0.0
  %478 = vmatprep.subr.mxu0 0.0
  %479 = vmatpush1.msra.mxu0 0.0
  %480 = vmatprep.subr.mxu0 0.0
  %481 = vmatpush1.msra.mxu0 0.0
  %482 = vmatprep.subr.mxu0 0.0
  %483 = vmatpush1.msra.mxu0 0.0
  %484 = vmatprep.subr.mxu0 0.0
  %485 = vmatpush1.msra.mxu0 0.0
  %486 = vmatprep.subr.mxu0 0.0
  %487 = vmatpush1.msra.mxu0 0.0
  %488 = vmatprep.subr.mxu0 0.0
  %489 = vmatpush1.msra.mxu0 0.0
  %490 = vmatprep.mubr.f32.mxu0 0.0
  %491 = vmatmul.mubr.f32.gmra.mrb[0].mxu0 %v424
  %v492 = vpop.f32.mrb[0].mxu0
  %v493 = vadd.f32 0.0, %v492
  %v494 = vpop.f32.mrb[0].mxu0
  %495 = vdwg.mxu0
  %v496 = vadd.f32 %v375, %v493
  %v497 = vxor.u32 %v496, 2147483648
  %v498 = vmul.f32 %v497, 1.442695
  %v499 = vpow.pop %v498
  %v500 = vadd.f32 %v499, 1.0
  %v501 = vrcp.pop %v500
  %v502 = vmul.f32 1.0, %v501
  %v503 = vtanh.pop %v496
  %504 = vrot.lane.b32.xlu0 %v422, 32
  %v505 = vpop.permute.xlu0 %504
  %v507 = vmul.f32 %v502, %v505
  %509 = vrot.lane.b32.xlu0 %v503, 64
  %v510 = vpop.permute.xlu0 %509
  %v512 = vmul.f32 %v502, %v510
  %514 = vrot.lane.b32.xlu0 %v512, 32
  %v515 = vpop.permute.xlu0 %514
  %v517 = vadd.f32 %v507, %v515
  %v518 = vtanh.pop %v517
  %520 = vrot.lane.b32.xlu0 %v518, 64
  %v521 = vpop.permute.xlu0 %520
  %v523 = vmul.f32 %v502, %v521
  %v525 = vlaneseq
  %v526 = vshrl.u32 %v525, 7
  %v527 = vsub.s32 0, %v526
  %v528 = vrot.slane %v421, %v527
  %531 = vrot.lane.b32.xlu0 %v523, 32
  %v532 = vpop.permute.xlu0 %531
  %v533 = vsel %vm56, %v532, 0
  %535 = vmatprep.subr.mxu0 0.0
  %536 = vmatpush1.msra.mxu0 %v417
  %537 = vmatprep.subr.mxu0 0.0
  %538 = vmatpush1.msra.mxu0 %v418
  %539 = vmatprep.subr.mxu0 0.0
  %540 = vmatpush1.msra.mxu0 %v419
  %541 = vmatprep.subr.mxu0 0.0
  %542 = vmatpush1.msra.mxu0 %v420
  %543 = vmatprep.subr.mxu0 0.0
  %544 = vmatpush1.msra.mxu0 0.0
  %545 = vmatprep.subr.mxu0 0.0
  %546 = vmatpush1.msra.mxu0 0.0
  %547 = vmatprep.subr.mxu0 0.0
  %548 = vmatpush1.msra.mxu0 0.0
  %549 = vmatprep.subr.mxu0 0.0
  %550 = vmatpush1.msra.mxu0 0.0
  %551 = vmatprep.subr.mxu0 0.0
  %552 = vmatpush1.msra.mxu0 0.0
  %553 = vmatprep.subr.mxu0 0.0
  %554 = vmatpush1.msra.mxu0 0.0
  %555 = vmatprep.subr.mxu0 0.0
  %556 = vmatpush1.msra.mxu0 0.0
  %557 = vmatprep.subr.mxu0 0.0
  %558 = vmatpush1.msra.mxu0 0.0
  %559 = vmatprep.subr.mxu0 0.0
  %560 = vmatpush1.msra.mxu0 0.0
  %561 = vmatprep.subr.mxu0 0.0
  %562 = vmatpush1.msra.mxu0 0.0
  %563 = vmatprep.subr.mxu0 0.0
  %564 = vmatpush1.msra.mxu0 0.0
  %565 = vmatprep.subr.mxu0 0.0
  %566 = vmatpush1.msra.mxu0 0.0
  %567 = vmatprep.subr.mxu0 0.0
  %568 = vmatpush1.msra.mxu0 0.0
  %569 = vmatprep.subr.mxu0 0.0
  %570 = vmatpush1.msra.mxu0 0.0
  %571 = vmatprep.subr.mxu0 0.0
  %572 = vmatpush1.msra.mxu0 0.0
  %573 = vmatprep.subr.mxu0 0.0
  %574 = vmatpush1.msra.mxu0 0.0
  %575 = vmatprep.subr.mxu0 0.0
  %576 = vmatpush1.msra.mxu0 0.0
  %577 = vmatprep.subr.mxu0 0.0
  %578 = vmatpush1.msra.mxu0 0.0
  %579 = vmatprep.subr.mxu0 0.0
  %580 = vmatpush1.msra.mxu0 0.0
  %581 = vmatprep.subr.mxu0 0.0
  %582 = vmatpush1.msra.mxu0 0.0
  %583 = vmatprep.subr.mxu0 0.0
  %584 = vmatpush1.msra.mxu0 0.0
  %585 = vmatprep.subr.mxu0 0.0
  %586 = vmatpush1.msra.mxu0 0.0
  %587 = vmatprep.subr.mxu0 0.0
  %588 = vmatpush1.msra.mxu0 0.0
  %589 = vmatprep.subr.mxu0 0.0
  %590 = vmatpush1.msra.mxu0 0.0
  %591 = vmatprep.subr.mxu0 0.0
  %592 = vmatpush1.msra.mxu0 0.0
  %593 = vmatprep.subr.mxu0 0.0
  %594 = vmatpush1.msra.mxu0 0.0
  %595 = vmatprep.subr.mxu0 0.0
  %596 = vmatpush1.msra.mxu0 0.0
  %597 = vmatprep.subr.mxu0 0.0
  %598 = vmatpush1.msra.mxu0 0.0
  %599 = vmatprep.mubr.f32.mxu0 0.0
  %600 = vmatmul.mubr.f32.gmra.mrb[0].mxu0 %v533
  %v601 = vpop.f32.mrb[0].mxu0
  %v602 = vadd.f32 %v528, %v601
  %v603 = vpop.f32.mrb[0].mxu0
  %604 = vdwg.mxu0
  %605 = vst [vmem:[%s8] sm:$0xff] %v602
  %606 = vmatprep.subr.mxu0 0.0
  %607 = vmatpush1.msra.mxu0 %v413
  %608 = vmatprep.subr.mxu0 0.0
  %609 = vmatpush1.msra.mxu0 %v414
  %610 = vmatprep.subr.mxu0 0.0
  %611 = vmatpush1.msra.mxu0 %v415
  %612 = vmatprep.subr.mxu0 0.0
  %613 = vmatpush1.msra.mxu0 %v416
  %614 = vmatprep.subr.mxu0 0.0
  %615 = vmatpush1.msra.mxu0 0.0
  %616 = vmatprep.subr.mxu0 0.0
  %617 = vmatpush1.msra.mxu0 0.0
  %618 = vmatprep.subr.mxu0 0.0
  %619 = vmatpush1.msra.mxu0 0.0
  %620 = vmatprep.subr.mxu0 0.0
  %621 = vmatpush1.msra.mxu0 0.0
  %622 = vmatprep.subr.mxu0 0.0
  %623 = vmatpush1.msra.mxu0 0.0
  %624 = vmatprep.subr.mxu0 0.0
  %625 = vmatpush1.msra.mxu0 0.0
  %626 = vmatprep.subr.mxu0 0.0
  %627 = vmatpush1.msra.mxu0 0.0
  %628 = vmatprep.subr.mxu0 0.0
  %629 = vmatpush1.msra.mxu0 0.0
  %630 = vmatprep.subr.mxu0 0.0
  %631 = vmatpush1.msra.mxu0 0.0
  %632 = vmatprep.subr.mxu0 0.0
  %633 = vmatpush1.msra.mxu0 0.0
  %634 = vmatprep.subr.mxu0 0.0
  %635 = vmatpush1.msra.mxu0 0.0
  %636 = vmatprep.subr.mxu0 0.0
  %637 = vmatpush1.msra.mxu0 0.0
  %638 = vmatprep.subr.mxu0 0.0
  %639 = vmatpush1.msra.mxu0 0.0
  %640 = vmatprep.subr.mxu0 0.0
  %641 = vmatpush1.msra.mxu0 0.0
  %642 = vmatprep.subr.mxu0 0.0
  %643 = vmatpush1.msra.mxu0 0.0
  %644 = vmatprep.subr.mxu0 0.0
  %645 = vmatpush1.msra.mxu0 0.0
  %646 = vmatprep.subr.mxu0 0.0
  %647 = vmatpush1.msra.mxu0 0.0
  %648 = vmatprep.subr.mxu0 0.0
  %649 = vmatpush1.msra.mxu0 0.0
  %650 = vmatprep.subr.mxu0 0.0
  %651 = vmatpush1.msra.mxu0 0.0
  %652 = vmatprep.subr.mxu0 0.0
  %653 = vmatpush1.msra.mxu0 0.0
  %654 = vmatprep.subr.mxu0 0.0
  %655 = vmatpush1.msra.mxu0 0.0
  %656 = vmatprep.subr.mxu0 0.0
  %657 = vmatpush1.msra.mxu0 0.0
  %658 = vmatprep.subr.mxu0 0.0
  %659 = vmatpush1.msra.mxu0 0.0
  %660 = vmatprep.subr.mxu0 0.0
  %661 = vmatpush1.msra.mxu0 0.0
  %662 = vmatprep.subr.mxu0 0.0
  %663 = vmatpush1.msra.mxu0 0.0
  %664 = vmatprep.subr.mxu0 0.0
  %665 = vmatpush1.msra.mxu0 0.0
  %666 = vmatprep.subr.mxu0 0.0
  %667 = vmatpush1.msra.mxu0 0.0
  %668 = vmatprep.subr.mxu0 0.0
  %669 = vmatpush1.msra.mxu0 0.0
  %670 = vmatprep.mubr.f32.mxu0 0.0
  %671 = vmatmul.mubr.f32.gmra.mrb[0].mxu0 %v533
  %v672 = vpop.f32.mrb[0].mxu0
  %v673 = vadd.f32 0.0, %v672
  %v674 = vpop.f32.mrb[0].mxu0
  %675 = vdwg.mxu0
  %v676 = vadd.f32 %v380, %v673
  %v677 = vxor.u32 %v676, 2147483648
  %v678 = vmul.f32 %v677, 1.442695
  %v679 = vpow.pop %v678
  %v680 = vadd.f32 %v679, 1.0
  %v681 = vrcp.pop %v680
  %v682 = vmul.f32 1.0, %v681
  %v683 = vtanh.pop %v676
  %v684 = vmul.f32 %v682, %v517
  %686 = vrot.lane.b32.xlu0 %v683, 64
  %v687 = vpop.permute.xlu0 %686
  %v689 = vmul.f32 %v682, %v687
  %691 = vrot.lane.b32.xlu0 %v689, 32
  %v692 = vpop.permute.xlu0 %691
  %v694 = vadd.f32 %v684, %v692
  %v695 = vtanh.pop %v694
  %697 = vrot.lane.b32.xlu0 %v695, 64
  %v698 = vpop.permute.xlu0 %697
  %v700 = vmul.f32 %v682, %v698
  %702 = vrot.lane.b32.xlu0 %v700, 32
  %v703 = vpop.permute.xlu0 %702
  %v704 = vsel %vm56, %v703, 0
  %706 = vmatprep.subr.mxu0 0.0
  %707 = vmatpush1.msra.mxu0 %v417
  %708 = vmatprep.subr.mxu0 0.0
  %709 = vmatpush1.msra.mxu0 %v418
  %710 = vmatprep.subr.mxu0 0.0
  %711 = vmatpush1.msra.mxu0 %v419
  %712 = vmatprep.subr.mxu0 0.0
  %713 = vmatpush1.msra.mxu0 %v420
  %714 = vmatprep.subr.mxu0 0.0
  %715 = vmatpush1.msra.mxu0 0.0
  %716 = vmatprep.subr.mxu0 0.0
  %717 = vmatpush1.msra.mxu0 0.0
  %718 = vmatprep.subr.mxu0 0.0
  %719 = vmatpush1.msra.mxu0 0.0
  %720 = vmatprep.subr.mxu0 0.0
  %721 = vmatpush1.msra.mxu0 0.0
  %722 = vmatprep.subr.mxu0 0.0
  %723 = vmatpush1.msra.mxu0 0.0
  %724 = vmatprep.subr.mxu0 0.0
  %725 = vmatpush1.msra.mxu0 0.0
  %726 = vmatprep.subr.mxu0 0.0
  %727 = vmatpush1.msra.mxu0 0.0
  %728 = vmatprep.subr.mxu0 0.0
  %729 = vmatpush1.msra.mxu0 0.0
  %730 = vmatprep.subr.mxu0 0.0
  %731 = vmatpush1.msra.mxu0 0.0
  %732 = vmatprep.subr.mxu0 0.0
  %733 = vmatpush1.msra.mxu0 0.0
  %734 = vmatprep.subr.mxu0 0.0
  %735 = vmatpush1.msra.mxu0 0.0
  %736 = vmatprep.subr.mxu0 0.0
  %737 = vmatpush1.msra.mxu0 0.0
  %738 = vmatprep.subr.mxu0 0.0
  %739 = vmatpush1.msra.mxu0 0.0
  %740 = vmatprep.subr.mxu0 0.0
  %741 = vmatpush1.msra.mxu0 0.0
  %742 = vmatprep.subr.mxu0 0.0
  %743 = vmatpush1.msra.mxu0 0.0
  %744 = vmatprep.subr.mxu0 0.0
  %745 = vmatpush1.msra.mxu0 0.0
  %746 = vmatprep.subr.mxu0 0.0
  %747 = vmatpush1.msra.mxu0 0.0
  %748 = vmatprep.subr.mxu0 0.0
  %749 = vmatpush1.msra.mxu0 0.0
  %750 = vmatprep.subr.mxu0 0.0
  %751 = vmatpush1.msra.mxu0 0.0
  %752 = vmatprep.subr.mxu0 0.0
  %753 = vmatpush1.msra.mxu0 0.0
  %754 = vmatprep.subr.mxu0 0.0
  %755 = vmatpush1.msra.mxu0 0.0
  %756 = vmatprep.subr.mxu0 0.0
  %757 = vmatpush1.msra.mxu0 0.0
  %758 = vmatprep.subr.mxu0 0.0
  %759 = vmatpush1.msra.mxu0 0.0
  %760 = vmatprep.subr.mxu0 0.0
  %761 = vmatpush1.msra.mxu0 0.0
  %762 = vmatprep.subr.mxu0 0.0
  %763 = vmatpush1.msra.mxu0 0.0
  %764 = vmatprep.subr.mxu0 0.0
  %765 = vmatpush1.msra.mxu0 0.0
  %766 = vmatprep.subr.mxu0 0.0
  %767 = vmatpush1.msra.mxu0 0.0
  %768 = vmatprep.subr.mxu0 0.0
  %769 = vmatpush1.msra.mxu0 0.0
  %770 = vmatprep.mubr.f32.mxu0 0.0
  %771 = vmatmul.mubr.f32.gmra.mrb[0].mxu0 %v704
  %v772 = vpop.f32.mrb[0].mxu0
  %v773 = vadd.f32 %v528, %v772
  %v774 = vpop.f32.mrb[0].mxu0
  %775 = vdwg.mxu0
  %776 = vst [vmem:[%s8 + $0x8] sm:$0xff] %v773
  %777 = vmatprep.subr.mxu0 0.0
  %778 = vmatpush1.msra.mxu0 %v413
  %779 = vmatprep.subr.mxu0 0.0
  %780 = vmatpush1.msra.mxu0 %v414
  %781 = vmatprep.subr.mxu0 0.0
  %782 = vmatpush1.msra.mxu0 %v415
  %783 = vmatprep.subr.mxu0 0.0
  %784 = vmatpush1.msra.mxu0 %v416
  %785 = vmatprep.subr.mxu0 0.0
  %786 = vmatpush1.msra.mxu0 0.0
  %787 = vmatprep.subr.mxu0 0.0
  %788 = vmatpush1.msra.mxu0 0.0
  %789 = vmatprep.subr.mxu0 0.0
  %790 = vmatpush1.msra.mxu0 0.0
  %791 = vmatprep.subr.mxu0 0.0
  %792 = vmatpush1.msra.mxu0 0.0
  %793 = vmatprep.subr.mxu0 0.0
  %794 = vmatpush1.msra.mxu0 0.0
  %795 = vmatprep.subr.mxu0 0.0
  %796 = vmatpush1.msra.mxu0 0.0
  %797 = vmatprep.subr.mxu0 0.0
  %798 = vmatpush1.msra.mxu0 0.0
  %799 = vmatprep.subr.mxu0 0.0
  %800 = vmatpush1.msra.mxu0 0.0
  %801 = vmatprep.subr.mxu0 0.0
  %802 = vmatpush1.msra.mxu0 0.0
  %803 = vmatprep.subr.mxu0 0.0
  %804 = vmatpush1.msra.mxu0 0.0
  %805 = vmatprep.subr.mxu0 0.0
  %806 = vmatpush1.msra.mxu0 0.0
  %807 = vmatprep.subr.mxu0 0.0
  %808 = vmatpush1.msra.mxu0 0.0
  %809 = vmatprep.subr.mxu0 0.0
  %810 = vmatpush1.msra.mxu0 0.0
  %811 = vmatprep.subr.mxu0 0.0
  %812 = vmatpush1.msra.mxu0 0.0
  %813 = vmatprep.subr.mxu0 0.0
  %814 = vmatpush1.msra.mxu0 0.0
  %815 = vmatprep.subr.mxu0 0.0
  %816 = vmatpush1.msra.mxu0 0.0
  %817 = vmatprep.subr.mxu0 0.0
  %818 = vmatpush1.msra.mxu0 0.0
  %819 = vmatprep.subr.mxu0 0.0
  %820 = vmatpush1.msra.mxu0 0.0
  %821 = vmatprep.subr.mxu0 0.0
  %822 = vmatpush1.msra.mxu0 0.0
  %823 = vmatprep.subr.mxu0 0.0
  %824 = vmatpush1.msra.mxu0 0.0
  %825 = vmatprep.subr.mxu0 0.0
  %826 = vmatpush1.msra.mxu0 0.0
  %827 = vmatprep.subr.mxu0 0.0
  %828 = vmatpush1.msra.mxu0 0.0
  %829 = vmatprep.subr.mxu0 0.0
  %830 = vmatpush1.msra.mxu0 0.0
  %831 = vmatprep.subr.mxu0 0.0
  %832 = vmatpush1.msra.mxu0 0.0
  %833 = vmatprep.subr.mxu0 0.0
  %834 = vmatpush1.msra.mxu0 0.0
  %835 = vmatprep.subr.mxu0 0.0
  %836 = vmatpush1.msra.mxu0 0.0
  %837 = vmatprep.subr.mxu0 0.0
  %838 = vmatpush1.msra.mxu0 0.0
  %839 = vmatprep.subr.mxu0 0.0
  %840 = vmatpush1.msra.mxu0 0.0
  %841 = vmatprep.mubr.f32.mxu0 0.0
  %842 = vmatmul.mubr.f32.gmra.mrb[0].mxu0 %v704
  %v843 = vpop.f32.mrb[0].mxu0
  %v844 = vadd.f32 0.0, %v843
  %v845 = vpop.f32.mrb[0].mxu0
  %846 = vdwg.mxu0
  %v847 = vadd.f32 %v385, %v844
  %v848 = vxor.u32 %v847, 2147483648
  %v849 = vmul.f32 %v848, 1.442695
  %v850 = vpow.pop %v849
  %v851 = vadd.f32 %v850, 1.0
  %v852 = vrcp.pop %v851
  %v853 = vmul.f32 1.0, %v852
  %v854 = vtanh.pop %v847
  %v855 = vmul.f32 %v853, %v694
  %857 = vrot.lane.b32.xlu0 %v854, 64
  %v858 = vpop.permute.xlu0 %857
  %v860 = vmul.f32 %v853, %v858
  %862 = vrot.lane.b32.xlu0 %v860, 32
  %v863 = vpop.permute.xlu0 %862
  %v865 = vadd.f32 %v855, %v863
  %v866 = vtanh.pop %v865
  %868 = vrot.lane.b32.xlu0 %v866, 64
  %v869 = vpop.permute.xlu0 %868
  %v871 = vmul.f32 %v853, %v869
  %873 = vrot.lane.b32.xlu0 %v871, 32
  %v874 = vpop.permute.xlu0 %873
  %v875 = vsel %vm56, %v874, 0
  %877 = vmatprep.subr.mxu0 0.0
  %878 = vmatpush1.msra.mxu0 %v417
  %879 = vmatprep.subr.mxu0 0.0
  %880 = vmatpush1.msra.mxu0 %v418
  %881 = vmatprep.subr.mxu0 0.0
  %882 = vmatpush1.msra.mxu0 %v419
  %883 = vmatprep.subr.mxu0 0.0
  %884 = vmatpush1.msra.mxu0 %v420
  %885 = vmatprep.subr.mxu0 0.0
  %886 = vmatpush1.msra.mxu0 0.0
  %887 = vmatprep.subr.mxu0 0.0
  %888 = vmatpush1.msra.mxu0 0.0
  %889 = vmatprep.subr.mxu0 0.0
  %890 = vmatpush1.msra.mxu0 0.0
  %891 = vmatprep.subr.mxu0 0.0
  %892 = vmatpush1.msra.mxu0 0.0
  %893 = vmatprep.subr.mxu0 0.0
  %894 = vmatpush1.msra.mxu0 0.0
  %895 = vmatprep.subr.mxu0 0.0
  %896 = vmatpush1.msra.mxu0 0.0
  %897 = vmatprep.subr.mxu0 0.0
  %898 = vmatpush1.msra.mxu0 0.0
  %899 = vmatprep.subr.mxu0 0.0
  %900 = vmatpush1.msra.mxu0 0.0
  %901 = vmatprep.subr.mxu0 0.0
  %902 = vmatpush1.msra.mxu0 0.0
  %903 = vmatprep.subr.mxu0 0.0
  %904 = vmatpush1.msra.mxu0 0.0
  %905 = vmatprep.subr.mxu0 0.0
  %906 = vmatpush1.msra.mxu0 0.0
  %907 = vmatprep.subr.mxu0 0.0
  %908 = vmatpush1.msra.mxu0 0.0
  %909 = vmatprep.subr.mxu0 0.0
  %910 = vmatpush1.msra.mxu0 0.0
  %911 = vmatprep.subr.mxu0 0.0
  %912 = vmatpush1.msra.mxu0 0.0
  %913 = vmatprep.subr.mxu0 0.0
  %914 = vmatpush1.msra.mxu0 0.0
  %915 = vmatprep.subr.mxu0 0.0
  %916 = vmatpush1.msra.mxu0 0.0
  %917 = vmatprep.subr.mxu0 0.0
  %918 = vmatpush1.msra.mxu0 0.0
  %919 = vmatprep.subr.mxu0 0.0
  %920 = vmatpush1.msra.mxu0 0.0
  %921 = vmatprep.subr.mxu0 0.0
  %922 = vmatpush1.msra.mxu0 0.0
  %923 = vmatprep.subr.mxu0 0.0
  %924 = vmatpush1.msra.mxu0 0.0
  %925 = vmatprep.subr.mxu0 0.0
  %926 = vmatpush1.msra.mxu0 0.0
  %927 = vmatprep.subr.mxu0 0.0
  %928 = vmatpush1.msra.mxu0 0.0
  %929 = vmatprep.subr.mxu0 0.0
  %930 = vmatpush1.msra.mxu0 0.0
  %931 = vmatprep.subr.mxu0 0.0
  %932 = vmatpush1.msra.mxu0 0.0
  %933 = vmatprep.subr.mxu0 0.0
  %934 = vmatpush1.msra.mxu0 0.0
  %935 = vmatprep.subr.mxu0 0.0
  %936 = vmatpush1.msra.mxu0 0.0
  %937 = vmatprep.subr.mxu0 0.0
  %938 = vmatpush1.msra.mxu0 0.0
  %939 = vmatprep.subr.mxu0 0.0
  %940 = vmatpush1.msra.mxu0 0.0
  %941 = vmatprep.mubr.f32.mxu0 0.0
  %942 = vmatmul.mubr.f32.gmra.mrb[0].mxu0 %v875
  %v943 = vpop.f32.mrb[0].mxu0
  %v944 = vadd.f32 %v528, %v943
  %v945 = vpop.f32.mrb[0].mxu0
  %946 = vdwg.mxu0
  %947 = vst [vmem:[%s8 + $0x10] sm:$0xff] %v944
  %948 = vmatprep.subr.mxu0 0.0
  %949 = vmatpush1.msra.mxu0 %v413
  %950 = vmatprep.subr.mxu0 0.0
  %951 = vmatpush1.msra.mxu0 %v414
  %952 = vmatprep.subr.mxu0 0.0
  %953 = vmatpush1.msra.mxu0 %v415
  %954 = vmatprep.subr.mxu0 0.0
  %955 = vmatpush1.msra.mxu0 %v416
  %956 = vmatprep.subr.mxu0 0.0
  %957 = vmatpush1.msra.mxu0 0.0
  %958 = vmatprep.subr.mxu0 0.0
  %959 = vmatpush1.msra.mxu0 0.0
  %960 = vmatprep.subr.mxu0 0.0
  %961 = vmatpush1.msra.mxu0 0.0
  %962 = vmatprep.subr.mxu0 0.0
  %963 = vmatpush1.msra.mxu0 0.0
  %964 = vmatprep.subr.mxu0 0.0
  %965 = vmatpush1.msra.mxu0 0.0
  %966 = vmatprep.subr.mxu0 0.0
  %967 = vmatpush1.msra.mxu0 0.0
  %968 = vmatprep.subr.mxu0 0.0
  %969 = vmatpush1.msra.mxu0 0.0
  %970 = vmatprep.subr.mxu0 0.0
  %971 = vmatpush1.msra.mxu0 0.0
  %972 = vmatprep.subr.mxu0 0.0
  %973 = vmatpush1.msra.mxu0 0.0
  %974 = vmatprep.subr.mxu0 0.0
  %975 = vmatpush1.msra.mxu0 0.0
  %976 = vmatprep.subr.mxu0 0.0
  %977 = vmatpush1.msra.mxu0 0.0
  %978 = vmatprep.subr.mxu0 0.0
  %979 = vmatpush1.msra.mxu0 0.0
  %980 = vmatprep.subr.mxu0 0.0
  %981 = vmatpush1.msra.mxu0 0.0
  %982 = vmatprep.subr.mxu0 0.0
  %983 = vmatpush1.msra.mxu0 0.0
  %984 = vmatprep.subr.mxu0 0.0
  %985 = vmatpush1.msra.mxu0 0.0
  %986 = vmatprep.subr.mxu0 0.0
  %987 = vmatpush1.msra.mxu0 0.0
  %988 = vmatprep.subr.mxu0 0.0
  %989 = vmatpush1.msra.mxu0 0.0
  %990 = vmatprep.subr.mxu0 0.0
  %991 = vmatpush1.msra.mxu0 0.0
  %992 = vmatprep.subr.mxu0 0.0
  %993 = vmatpush1.msra.mxu0 0.0
  %994 = vmatprep.subr.mxu0 0.0
  %995 = vmatpush1.msra.mxu0 0.0
  %996 = vmatprep.subr.mxu0 0.0
  %997 = vmatpush1.msra.mxu0 0.0
  %998 = vmatprep.subr.mxu0 0.0
  %999 = vmatpush1.msra.mxu0 0.0
  %1000 = vmatprep.subr.mxu0 0.0
  %1001 = vmatpush1.msra.mxu0 0.0
  %1002 = vmatprep.subr.mxu0 0.0
  %1003 = vmatpush1.msra.mxu0 0.0
  %1004 = vmatprep.subr.mxu0 0.0
  %1005 = vmatpush1.msra.mxu0 0.0
  %1006 = vmatprep.subr.mxu0 0.0
  %1007 = vmatpush1.msra.mxu0 0.0
  %1008 = vmatprep.subr.mxu0 0.0
  %1009 = vmatpush1.msra.mxu0 0.0
  %1010 = vmatprep.subr.mxu0 0.0
  %1011 = vmatpush1.msra.mxu0 0.0
  %1012 = vmatprep.mubr.f32.mxu0 0.0
  %1013 = vmatmul.mubr.f32.gmra.mrb[0].mxu0 %v875
  %v1014 = vpop.f32.mrb[0].mxu0
  %v1015 = vadd.f32 0.0, %v1014
  %v1016 = vpop.f32.mrb[0].mxu0
  %1017 = vdwg.mxu0
  %v1018 = vadd.f32 %v390, %v1015
  %v1019 = vxor.u32 %v1018, 2147483648
  %v1020 = vmul.f32 %v1019, 1.442695
  %v1021 = vpow.pop %v1020
  %v1022 = vadd.f32 %v1021, 1.0
  %v1023 = vrcp.pop %v1022
  %v1024 = vmul.f32 1.0, %v1023
  %v1025 = vtanh.pop %v1018
  %v1026 = vmul.f32 %v1024, %v865
  %1028 = vrot.lane.b32.xlu0 %v1025, 64
  %v1029 = vpop.permute.xlu0 %1028
  %v1031 = vmul.f32 %v1024, %v1029
  %1033 = vrot.lane.b32.xlu0 %v1031, 32
  %v1034 = vpop.permute.xlu0 %1033
  %v1036 = vadd.f32 %v1026, %v1034
  %v1037 = vtanh.pop %v1036
  %1039 = vrot.lane.b32.xlu0 %v1037, 64
  %v1040 = vpop.permute.xlu0 %1039
  %v1042 = vmul.f32 %v1024, %v1040
  %1044 = vrot.lane.b32.xlu0 %v1042, 32
  %v1045 = vpop.permute.xlu0 %1044
  %v1046 = vsel %vm56, %v1045, 0
  %1048 = vmatprep.subr.mxu0 0.0
  %1049 = vmatpush1.msra.mxu0 %v417
  %1050 = vmatprep.subr.mxu0 0.0
  %1051 = vmatpush1.msra.mxu0 %v418
  %1052 = vmatprep.subr.mxu0 0.0
  %1053 = vmatpush1.msra.mxu0 %v419
  %1054 = vmatprep.subr.mxu0 0.0
  %1055 = vmatpush1.msra.mxu0 %v420
  %1056 = vmatprep.subr.mxu0 0.0
  %1057 = vmatpush1.msra.mxu0 0.0
  %1058 = vmatprep.subr.mxu0 0.0
  %1059 = vmatpush1.msra.mxu0 0.0
  %1060 = vmatprep.subr.mxu0 0.0
  %1061 = vmatpush1.msra.mxu0 0.0
  %1062 = vmatprep.subr.mxu0 0.0
  %1063 = vmatpush1.msra.mxu0 0.0
  %1064 = vmatprep.subr.mxu0 0.0
  %1065 = vmatpush1.msra.mxu0 0.0
  %1066 = vmatprep.subr.mxu0 0.0
  %1067 = vmatpush1.msra.mxu0 0.0
  %1068 = vmatprep.subr.mxu0 0.0
  %1069 = vmatpush1.msra.mxu0 0.0
  %1070 = vmatprep.subr.mxu0 0.0
  %1071 = vmatpush1.msra.mxu0 0.0
  %1072 = vmatprep.subr.mxu0 0.0
  %1073 = vmatpush1.msra.mxu0 0.0
  %1074 = vmatprep.subr.mxu0 0.0
  %1075 = vmatpush1.msra.mxu0 0.0
  %1076 = vmatprep.subr.mxu0 0.0
  %1077 = vmatpush1.msra.mxu0 0.0
  %1078 = vmatprep.subr.mxu0 0.0
  %1079 = vmatpush1.msra.mxu0 0.0
  %1080 = vmatprep.subr.mxu0 0.0
  %1081 = vmatpush1.msra.mxu0 0.0
  %1082 = vmatprep.subr.mxu0 0.0
  %1083 = vmatpush1.msra.mxu0 0.0
  %1084 = vmatprep.subr.mxu0 0.0
  %1085 = vmatpush1.msra.mxu0 0.0
  %1086 = vmatprep.subr.mxu0 0.0
  %1087 = vmatpush1.msra.mxu0 0.0
  %1088 = vmatprep.subr.mxu0 0.0
  %1089 = vmatpush1.msra.mxu0 0.0
  %1090 = vmatprep.subr.mxu0 0.0
  %1091 = vmatpush1.msra.mxu0 0.0
  %1092 = vmatprep.subr.mxu0 0.0
  %1093 = vmatpush1.msra.mxu0 0.0
  %1094 = vmatprep.subr.mxu0 0.0
  %1095 = vmatpush1.msra.mxu0 0.0
  %1096 = vmatprep.subr.mxu0 0.0
  %1097 = vmatpush1.msra.mxu0 0.0
  %1098 = vmatprep.subr.mxu0 0.0
  %1099 = vmatpush1.msra.mxu0 0.0
  %1100 = vmatprep.subr.mxu0 0.0
  %1101 = vmatpush1.msra.mxu0 0.0
  %1102 = vmatprep.subr.mxu0 0.0
  %1103 = vmatpush1.msra.mxu0 0.0
  %1104 = vmatprep.subr.mxu0 0.0
  %1105 = vmatpush1.msra.mxu0 0.0
  %1106 = vmatprep.subr.mxu0 0.0
  %1107 = vmatpush1.msra.mxu0 0.0
  %1108 = vmatprep.subr.mxu0 0.0
  %1109 = vmatpush1.msra.mxu0 0.0
  %1110 = vmatprep.subr.mxu0 0.0
  %1111 = vmatpush1.msra.mxu0 0.0
  %1112 = vmatprep.mubr.f32.mxu0 0.0
  %1113 = vmatmul.mubr.f32.gmra.mrb[0].mxu0 %v1046
  %v1114 = vpop.f32.mrb[0].mxu0
  %v1115 = vadd.f32 %v528, %v1114
  %v1116 = vpop.f32.mrb[0].mxu0
  %1117 = vdwg.mxu0
  %1118 = vst [vmem:[%s8 + $0x18] sm:$0xff] %v1115
  %1119 = vmatprep.subr.mxu0 0.0
  %1120 = vmatpush1.msra.mxu0 %v413
  %1121 = vmatprep.subr.mxu0 0.0
  %1122 = vmatpush1.msra.mxu0 %v414
  %1123 = vmatprep.subr.mxu0 0.0
  %1124 = vmatpush1.msra.mxu0 %v415
  %1125 = vmatprep.subr.mxu0 0.0
  %1126 = vmatpush1.msra.mxu0 %v416
  %1127 = vmatprep.subr.mxu0 0.0
  %1128 = vmatpush1.msra.mxu0 0.0
  %1129 = vmatprep.subr.mxu0 0.0
  %1130 = vmatpush1.msra.mxu0 0.0
  %1131 = vmatprep.subr.mxu0 0.0
  %1132 = vmatpush1.msra.mxu0 0.0
  %1133 = vmatprep.subr.mxu0 0.0
  %1134 = vmatpush1.msra.mxu0 0.0
  %1135 = vmatprep.subr.mxu0 0.0
  %1136 = vmatpush1.msra.mxu0 0.0
  %1137 = vmatprep.subr.mxu0 0.0
  %1138 = vmatpush1.msra.mxu0 0.0
  %1139 = vmatprep.subr.mxu0 0.0
  %1140 = vmatpush1.msra.mxu0 0.0
  %1141 = vmatprep.subr.mxu0 0.0
  %1142 = vmatpush1.msra.mxu0 0.0
  %1143 = vmatprep.subr.mxu0 0.0
  %1144 = vmatpush1.msra.mxu0 0.0
  %1145 = vmatprep.subr.mxu0 0.0
  %1146 = vmatpush1.msra.mxu0 0.0
  %1147 = vmatprep.subr.mxu0 0.0
  %1148 = vmatpush1.msra.mxu0 0.0
  %1149 = vmatprep.subr.mxu0 0.0
  %1150 = vmatpush1.msra.mxu0 0.0
  %1151 = vmatprep.subr.mxu0 0.0
  %1152 = vmatpush1.msra.mxu0 0.0
  %1153 = vmatprep.subr.mxu0 0.0
  %1154 = vmatpush1.msra.mxu0 0.0
  %1155 = vmatprep.subr.mxu0 0.0
  %1156 = vmatpush1.msra.mxu0 0.0
  %1157 = vmatprep.subr.mxu0 0.0
  %1158 = vmatpush1.msra.mxu0 0.0
  %1159 = vmatprep.subr.mxu0 0.0
  %1160 = vmatpush1.msra.mxu0 0.0
  %1161 = vmatprep.subr.mxu0 0.0
  %1162 = vmatpush1.msra.mxu0 0.0
  %1163 = vmatprep.subr.mxu0 0.0
  %1164 = vmatpush1.msra.mxu0 0.0
  %1165 = vmatprep.subr.mxu0 0.0
  %1166 = vmatpush1.msra.mxu0 0.0
  %1167 = vmatprep.subr.mxu0 0.0
  %1168 = vmatpush1.msra.mxu0 0.0
  %1169 = vmatprep.subr.mxu0 0.0
  %1170 = vmatpush1.msra.mxu0 0.0
  %1171 = vmatprep.subr.mxu0 0.0
  %1172 = vmatpush1.msra.mxu0 0.0
  %1173 = vmatprep.subr.mxu0 0.0
  %1174 = vmatpush1.msra.mxu0 0.0
  %1175 = vmatprep.subr.mxu0 0.0
  %1176 = vmatpush1.msra.mxu0 0.0
  %1177 = vmatprep.subr.mxu0 0.0
  %1178 = vmatpush1.msra.mxu0 0.0
  %1179 = vmatprep.subr.mxu0 0.0
  %1180 = vmatpush1.msra.mxu0 0.0
  %1181 = vmatprep.subr.mxu0 0.0
  %1182 = vmatpush1.msra.mxu0 0.0
  %1183 = vmatprep.mubr.f32.mxu0 0.0
  %1184 = vmatmul.mubr.f32.gmra.mrb[0].mxu0 %v1046
  %v1185 = vpop.f32.mrb[0].mxu0
  %v1186 = vadd.f32 0.0, %v1185
  %v1187 = vpop.f32.mrb[0].mxu0
  %1188 = vdwg.mxu0
  %v1189 = vadd.f32 %v395, %v1186
  %v1190 = vxor.u32 %v1189, 2147483648
  %v1191 = vmul.f32 %v1190, 1.442695
  %v1192 = vpow.pop %v1191
  %v1193 = vadd.f32 %v1192, 1.0
  %v1194 = vrcp.pop %v1193
  %v1195 = vmul.f32 1.0, %v1194
  %v1196 = vtanh.pop %v1189
  %v1197 = vmul.f32 %v1195, %v1036
  %1199 = vrot.lane.b32.xlu0 %v1196, 64
  %v1200 = vpop.permute.xlu0 %1199
  %v1202 = vmul.f32 %v1195, %v1200
  %1204 = vrot.lane.b32.xlu0 %v1202, 32
  %v1205 = vpop.permute.xlu0 %1204
  %v1207 = vadd.f32 %v1197, %v1205
  %v1208 = vtanh.pop %v1207
  %1210 = vrot.lane.b32.xlu0 %v1208, 64
  %v1211 = vpop.permute.xlu0 %1210
  %v1213 = vmul.f32 %v1195, %v1211
  %1215 = vrot.lane.b32.xlu0 %v1213, 32
  %v1216 = vpop.permute.xlu0 %1215
  %v1217 = vsel %vm56, %v1216, 0
  %1219 = vmatprep.subr.mxu0 0.0
  %1220 = vmatpush1.msra.mxu0 %v417
  %1221 = vmatprep.subr.mxu0 0.0
  %1222 = vmatpush1.msra.mxu0 %v418
  %1223 = vmatprep.subr.mxu0 0.0
  %1224 = vmatpush1.msra.mxu0 %v419
  %1225 = vmatprep.subr.mxu0 0.0
  %1226 = vmatpush1.msra.mxu0 %v420
  %1227 = vmatprep.subr.mxu0 0.0
  %1228 = vmatpush1.msra.mxu0 0.0
  %1229 = vmatprep.subr.mxu0 0.0
  %1230 = vmatpush1.msra.mxu0 0.0
  %1231 = vmatprep.subr.mxu0 0.0
  %1232 = vmatpush1.msra.mxu0 0.0
  %1233 = vmatprep.subr.mxu0 0.0
  %1234 = vmatpush1.msra.mxu0 0.0
  %1235 = vmatprep.subr.mxu0 0.0
  %1236 = vmatpush1.msra.mxu0 0.0
  %1237 = vmatprep.subr.mxu0 0.0
  %1238 = vmatpush1.msra.mxu0 0.0
  %1239 = vmatprep.subr.mxu0 0.0
  %1240 = vmatpush1.msra.mxu0 0.0
  %1241 = vmatprep.subr.mxu0 0.0
  %1242 = vmatpush1.msra.mxu0 0.0
  %1243 = vmatprep.subr.mxu0 0.0
  %1244 = vmatpush1.msra.mxu0 0.0
  %1245 = vmatprep.subr.mxu0 0.0
  %1246 = vmatpush1.msra.mxu0 0.0
  %1247 = vmatprep.subr.mxu0 0.0
  %1248 = vmatpush1.msra.mxu0 0.0
  %1249 = vmatprep.subr.mxu0 0.0
  %1250 = vmatpush1.msra.mxu0 0.0
  %1251 = vmatprep.subr.mxu0 0.0
  %1252 = vmatpush1.msra.mxu0 0.0
  %1253 = vmatprep.subr.mxu0 0.0
  %1254 = vmatpush1.msra.mxu0 0.0
  %1255 = vmatprep.subr.mxu0 0.0
  %1256 = vmatpush1.msra.mxu0 0.0
  %1257 = vmatprep.subr.mxu0 0.0
  %1258 = vmatpush1.msra.mxu0 0.0
  %1259 = vmatprep.subr.mxu0 0.0
  %1260 = vmatpush1.msra.mxu0 0.0
  %1261 = vmatprep.subr.mxu0 0.0
  %1262 = vmatpush1.msra.mxu0 0.0
  %1263 = vmatprep.subr.mxu0 0.0
  %1264 = vmatpush1.msra.mxu0 0.0
  %1265 = vmatprep.subr.mxu0 0.0
  %1266 = vmatpush1.msra.mxu0 0.0
  %1267 = vmatprep.subr.mxu0 0.0
  %1268 = vmatpush1.msra.mxu0 0.0
  %1269 = vmatprep.subr.mxu0 0.0
  %1270 = vmatpush1.msra.mxu0 0.0
  %1271 = vmatprep.subr.mxu0 0.0
  %1272 = vmatpush1.msra.mxu0 0.0
  %1273 = vmatprep.subr.mxu0 0.0
  %1274 = vmatpush1.msra.mxu0 0.0
  %1275 = vmatprep.subr.mxu0 0.0
  %1276 = vmatpush1.msra.mxu0 0.0
  %1277 = vmatprep.subr.mxu0 0.0
  %1278 = vmatpush1.msra.mxu0 0.0
  %1279 = vmatprep.subr.mxu0 0.0
  %1280 = vmatpush1.msra.mxu0 0.0
  %1281 = vmatprep.subr.mxu0 0.0
  %1282 = vmatpush1.msra.mxu0 0.0
  %1283 = vmatprep.mubr.f32.mxu0 0.0
  %1284 = vmatmul.mubr.f32.gmra.mrb[0].mxu0 %v1217
  %v1285 = vpop.f32.mrb[0].mxu0
  %v1286 = vadd.f32 %v528, %v1285
  %v1287 = vpop.f32.mrb[0].mxu0
  %1288 = vdwg.mxu0
  %1289 = vst [vmem:[%s8 + $0x20] sm:$0xff] %v1286
  %1290 = vmatprep.subr.mxu0 0.0
  %1291 = vmatpush1.msra.mxu0 %v413
  %1292 = vmatprep.subr.mxu0 0.0
  %1293 = vmatpush1.msra.mxu0 %v414
  %1294 = vmatprep.subr.mxu0 0.0
  %1295 = vmatpush1.msra.mxu0 %v415
  %1296 = vmatprep.subr.mxu0 0.0
  %1297 = vmatpush1.msra.mxu0 %v416
  %1298 = vmatprep.subr.mxu0 0.0
  %1299 = vmatpush1.msra.mxu0 0.0
  %1300 = vmatprep.subr.mxu0 0.0
  %1301 = vmatpush1.msra.mxu0 0.0
  %1302 = vmatprep.subr.mxu0 0.0
  %1303 = vmatpush1.msra.mxu0 0.0
  %1304 = vmatprep.subr.mxu0 0.0
  %1305 = vmatpush1.msra.mxu0 0.0
  %1306 = vmatprep.subr.mxu0 0.0
  %1307 = vmatpush1.msra.mxu0 0.0
  %1308 = vmatprep.subr.mxu0 0.0
  %1309 = vmatpush1.msra.mxu0 0.0
  %1310 = vmatprep.subr.mxu0 0.0
  %1311 = vmatpush1.msra.mxu0 0.0
  %1312 = vmatprep.subr.mxu0 0.0
  %1313 = vmatpush1.msra.mxu0 0.0
  %1314 = vmatprep.subr.mxu0 0.0
  %1315 = vmatpush1.msra.mxu0 0.0
  %1316 = vmatprep.subr.mxu0 0.0
  %1317 = vmatpush1.msra.mxu0 0.0
  %1318 = vmatprep.subr.mxu0 0.0
  %1319 = vmatpush1.msra.mxu0 0.0
  %1320 = vmatprep.subr.mxu0 0.0
  %1321 = vmatpush1.msra.mxu0 0.0
  %1322 = vmatprep.subr.mxu0 0.0
  %1323 = vmatpush1.msra.mxu0 0.0
  %1324 = vmatprep.subr.mxu0 0.0
  %1325 = vmatpush1.msra.mxu0 0.0
  %1326 = vmatprep.subr.mxu0 0.0
  %1327 = vmatpush1.msra.mxu0 0.0
  %1328 = vmatprep.subr.mxu0 0.0
  %1329 = vmatpush1.msra.mxu0 0.0
  %1330 = vmatprep.subr.mxu0 0.0
  %1331 = vmatpush1.msra.mxu0 0.0
  %1332 = vmatprep.subr.mxu0 0.0
  %1333 = vmatpush1.msra.mxu0 0.0
  %1334 = vmatprep.subr.mxu0 0.0
  %1335 = vmatpush1.msra.mxu0 0.0
  %1336 = vmatprep.subr.mxu0 0.0
  %1337 = vmatpush1.msra.mxu0 0.0
  %1338 = vmatprep.subr.mxu0 0.0
  %1339 = vmatpush1.msra.mxu0 0.0
  %1340 = vmatprep.subr.mxu0 0.0
  %1341 = vmatpush1.msra.mxu0 0.0
  %1342 = vmatprep.subr.mxu0 0.0
  %1343 = vmatpush1.msra.mxu0 0.0
  %1344 = vmatprep.subr.mxu0 0.0
  %1345 = vmatpush1.msra.mxu0 0.0
  %1346 = vmatprep.subr.mxu0 0.0
  %1347 = vmatpush1.msra.mxu0 0.0
  %1348 = vmatprep.subr.mxu0 0.0
  %1349 = vmatpush1.msra.mxu0 0.0
  %1350 = vmatprep.subr.mxu0 0.0
  %1351 = vmatpush1.msra.mxu0 0.0
  %1352 = vmatprep.subr.mxu0 0.0
  %1353 = vmatpush1.msra.mxu0 0.0
  %1354 = vmatprep.mubr.f32.mxu0 0.0
  %1355 = vmatmul.mubr.f32.gmra.mrb[0].mxu0 %v1217
  %v1356 = vpop.f32.mrb[0].mxu0
  %v1357 = vadd.f32 0.0, %v1356
  %v1358 = vpop.f32.mrb[0].mxu0
  %1359 = vdwg.mxu0
  %v1360 = vadd.f32 %v400, %v1357
  %v1361 = vxor.u32 %v1360, 2147483648
  %v1362 = vmul.f32 %v1361, 1.442695
  %v1363 = vpow.pop %v1362
  %v1364 = vadd.f32 %v1363, 1.0
  %v1365 = vrcp.pop %v1364
  %v1366 = vmul.f32 1.0, %v1365
  %v1367 = vtanh.pop %v1360
  %v1368 = vmul.f32 %v1366, %v1207
  %1370 = vrot.lane.b32.xlu0 %v1367, 64
  %v1371 = vpop.permute.xlu0 %1370
  %v1373 = vmul.f32 %v1366, %v1371
  %1375 = vrot.lane.b32.xlu0 %v1373, 32
  %v1376 = vpop.permute.xlu0 %1375
  %v1378 = vadd.f32 %v1368, %v1376
  %v1379 = vtanh.pop %v1378
  %1381 = vrot.lane.b32.xlu0 %v1379, 64
  %v1382 = vpop.permute.xlu0 %1381
  %v1384 = vmul.f32 %v1366, %v1382
  %1386 = vrot.lane.b32.xlu0 %v1384, 32
  %v1387 = vpop.permute.xlu0 %1386
  %v1388 = vsel %vm56, %v1387, 0
  %1390 = vmatprep.subr.mxu0 0.0
  %1391 = vmatpush1.msra.mxu0 %v417
  %1392 = vmatprep.subr.mxu0 0.0
  %1393 = vmatpush1.msra.mxu0 %v418
  %1394 = vmatprep.subr.mxu0 0.0
  %1395 = vmatpush1.msra.mxu0 %v419
  %1396 = vmatprep.subr.mxu0 0.0
  %1397 = vmatpush1.msra.mxu0 %v420
  %1398 = vmatprep.subr.mxu0 0.0
  %1399 = vmatpush1.msra.mxu0 0.0
  %1400 = vmatprep.subr.mxu0 0.0
  %1401 = vmatpush1.msra.mxu0 0.0
  %1402 = vmatprep.subr.mxu0 0.0
  %1403 = vmatpush1.msra.mxu0 0.0
  %1404 = vmatprep.subr.mxu0 0.0
  %1405 = vmatpush1.msra.mxu0 0.0
  %1406 = vmatprep.subr.mxu0 0.0
  %1407 = vmatpush1.msra.mxu0 0.0
  %1408 = vmatprep.subr.mxu0 0.0
  %1409 = vmatpush1.msra.mxu0 0.0
  %1410 = vmatprep.subr.mxu0 0.0
  %1411 = vmatpush1.msra.mxu0 0.0
  %1412 = vmatprep.subr.mxu0 0.0
  %1413 = vmatpush1.msra.mxu0 0.0
  %1414 = vmatprep.subr.mxu0 0.0
  %1415 = vmatpush1.msra.mxu0 0.0
  %1416 = vmatprep.subr.mxu0 0.0
  %1417 = vmatpush1.msra.mxu0 0.0
  %1418 = vmatprep.subr.mxu0 0.0
  %1419 = vmatpush1.msra.mxu0 0.0
  %1420 = vmatprep.subr.mxu0 0.0
  %1421 = vmatpush1.msra.mxu0 0.0
  %1422 = vmatprep.subr.mxu0 0.0
  %1423 = vmatpush1.msra.mxu0 0.0
  %1424 = vmatprep.subr.mxu0 0.0
  %1425 = vmatpush1.msra.mxu0 0.0
  %1426 = vmatprep.subr.mxu0 0.0
  %1427 = vmatpush1.msra.mxu0 0.0
  %1428 = vmatprep.subr.mxu0 0.0
  %1429 = vmatpush1.msra.mxu0 0.0
  %1430 = vmatprep.subr.mxu0 0.0
  %1431 = vmatpush1.msra.mxu0 0.0
  %1432 = vmatprep.subr.mxu0 0.0
  %1433 = vmatpush1.msra.mxu0 0.0
  %1434 = vmatprep.subr.mxu0 0.0
  %1435 = vmatpush1.msra.mxu0 0.0
  %1436 = vmatprep.subr.mxu0 0.0
  %1437 = vmatpush1.msra.mxu0 0.0
  %1438 = vmatprep.subr.mxu0 0.0
  %1439 = vmatpush1.msra.mxu0 0.0
  %1440 = vmatprep.subr.mxu0 0.0
  %1441 = vmatpush1.msra.mxu0 0.0
  %1442 = vmatprep.subr.mxu0 0.0
  %1443 = vmatpush1.msra.mxu0 0.0
  %1444 = vmatprep.subr.mxu0 0.0
  %1445 = vmatpush1.msra.mxu0 0.0
  %1446 = vmatprep.subr.mxu0 0.0
  %1447 = vmatpush1.msra.mxu0 0.0
  %1448 = vmatprep.subr.mxu0 0.0
  %1449 = vmatpush1.msra.mxu0 0.0
  %1450 = vmatprep.subr.mxu0 0.0
  %1451 = vmatpush1.msra.mxu0 0.0
  %1452 = vmatprep.subr.mxu0 0.0
  %1453 = vmatpush1.msra.mxu0 0.0
  %1454 = vmatprep.mubr.f32.mxu0 0.0
  %1455 = vmatmul.mubr.f32.gmra.mrb[0].mxu0 %v1388
  %v1456 = vpop.f32.mrb[0].mxu0
  %v1457 = vadd.f32 %v528, %v1456
  %v1458 = vpop.f32.mrb[0].mxu0
  %1459 = vdwg.mxu0
  %1460 = vst [vmem:[%s8 + $0x28] sm:$0xff] %v1457
  %1461 = vmatprep.subr.mxu0 0.0
  %1462 = vmatpush1.msra.mxu0 %v413
  %1463 = vmatprep.subr.mxu0 0.0
  %1464 = vmatpush1.msra.mxu0 %v414
  %1465 = vmatprep.subr.mxu0 0.0
  %1466 = vmatpush1.msra.mxu0 %v415
  %1467 = vmatprep.subr.mxu0 0.0
  %1468 = vmatpush1.msra.mxu0 %v416
  %1469 = vmatprep.subr.mxu0 0.0
  %1470 = vmatpush1.msra.mxu0 0.0
  %1471 = vmatprep.subr.mxu0 0.0
  %1472 = vmatpush1.msra.mxu0 0.0
  %1473 = vmatprep.subr.mxu0 0.0
  %1474 = vmatpush1.msra.mxu0 0.0
  %1475 = vmatprep.subr.mxu0 0.0
  %1476 = vmatpush1.msra.mxu0 0.0
  %1477 = vmatprep.subr.mxu0 0.0
  %1478 = vmatpush1.msra.mxu0 0.0
  %1479 = vmatprep.subr.mxu0 0.0
  %1480 = vmatpush1.msra.mxu0 0.0
  %1481 = vmatprep.subr.mxu0 0.0
  %1482 = vmatpush1.msra.mxu0 0.0
  %1483 = vmatprep.subr.mxu0 0.0
  %1484 = vmatpush1.msra.mxu0 0.0
  %1485 = vmatprep.subr.mxu0 0.0
  %1486 = vmatpush1.msra.mxu0 0.0
  %1487 = vmatprep.subr.mxu0 0.0
  %1488 = vmatpush1.msra.mxu0 0.0
  %1489 = vmatprep.subr.mxu0 0.0
  %1490 = vmatpush1.msra.mxu0 0.0
  %1491 = vmatprep.subr.mxu0 0.0
  %1492 = vmatpush1.msra.mxu0 0.0
  %1493 = vmatprep.subr.mxu0 0.0
  %1494 = vmatpush1.msra.mxu0 0.0
  %1495 = vmatprep.subr.mxu0 0.0
  %1496 = vmatpush1.msra.mxu0 0.0
  %1497 = vmatprep.subr.mxu0 0.0
  %1498 = vmatpush1.msra.mxu0 0.0
  %1499 = vmatprep.subr.mxu0 0.0
  %1500 = vmatpush1.msra.mxu0 0.0
  %1501 = vmatprep.subr.mxu0 0.0
  %1502 = vmatpush1.msra.mxu0 0.0
  %1503 = vmatprep.subr.mxu0 0.0
  %1504 = vmatpush1.msra.mxu0 0.0
  %1505 = vmatprep.subr.mxu0 0.0
  %1506 = vmatpush1.msra.mxu0 0.0
  %1507 = vmatprep.subr.mxu0 0.0
  %1508 = vmatpush1.msra.mxu0 0.0
  %1509 = vmatprep.subr.mxu0 0.0
  %1510 = vmatpush1.msra.mxu0 0.0
  %1511 = vmatprep.subr.mxu0 0.0
  %1512 = vmatpush1.msra.mxu0 0.0
  %1513 = vmatprep.subr.mxu0 0.0
  %1514 = vmatpush1.msra.mxu0 0.0
  %1515 = vmatprep.subr.mxu0 0.0
  %1516 = vmatpush1.msra.mxu0 0.0
  %1517 = vmatprep.subr.mxu0 0.0
  %1518 = vmatpush1.msra.mxu0 0.0
  %1519 = vmatprep.subr.mxu0 0.0
  %1520 = vmatpush1.msra.mxu0 0.0
  %1521 = vmatprep.subr.mxu0 0.0
  %1522 = vmatpush1.msra.mxu0 0.0
  %1523 = vmatprep.subr.mxu0 0.0
  %1524 = vmatpush1.msra.mxu0 0.0
  %1525 = vmatprep.mubr.f32.mxu0 0.0
  %1526 = vmatmul.mubr.f32.gmra.mrb[0].mxu0 %v1388
  %v1527 = vpop.f32.mrb[0].mxu0
  %v1528 = vadd.f32 0.0, %v1527
  %v1529 = vpop.f32.mrb[0].mxu0
  %1530 = vdwg.mxu0
  %v1531 = vadd.f32 %v405, %v1528
  %v1532 = vxor.u32 %v1531, 2147483648
  %v1533 = vmul.f32 %v1532, 1.442695
  %v1534 = vpow.pop %v1533
  %v1535 = vadd.f32 %v1534, 1.0
  %v1536 = vrcp.pop %v1535
  %v1537 = vmul.f32 1.0, %v1536
  %v1538 = vtanh.pop %v1531
  %v1539 = vmul.f32 %v1537, %v1378
  %1541 = vrot.lane.b32.xlu0 %v1538, 64
  %v1542 = vpop.permute.xlu0 %1541
  %v1544 = vmul.f32 %v1537, %v1542
  %1546 = vrot.lane.b32.xlu0 %v1544, 32
  %v1547 = vpop.permute.xlu0 %1546
  %v1549 = vadd.f32 %v1539, %v1547
  %v1550 = vtanh.pop %v1549
  %1552 = vrot.lane.b32.xlu0 %v1550, 64
  %v1553 = vpop.permute.xlu0 %1552
  %v1555 = vmul.f32 %v1537, %v1553
  %1557 = vrot.lane.b32.xlu0 %v1555, 32
  %v1558 = vpop.permute.xlu0 %1557
  %v1559 = vsel %vm56, %v1558, 0
  %1561 = vmatprep.subr.mxu0 0.0
  %1562 = vmatpush1.msra.mxu0 %v417
  %1563 = vmatprep.subr.mxu0 0.0
  %1564 = vmatpush1.msra.mxu0 %v418
  %1565 = vmatprep.subr.mxu0 0.0
  %1566 = vmatpush1.msra.mxu0 %v419
  %1567 = vmatprep.subr.mxu0 0.0
  %1568 = vmatpush1.msra.mxu0 %v420
  %1569 = vmatprep.subr.mxu0 0.0
  %1570 = vmatpush1.msra.mxu0 0.0
  %1571 = vmatprep.subr.mxu0 0.0
  %1572 = vmatpush1.msra.mxu0 0.0
  %1573 = vmatprep.subr.mxu0 0.0
  %1574 = vmatpush1.msra.mxu0 0.0
  %1575 = vmatprep.subr.mxu0 0.0
  %1576 = vmatpush1.msra.mxu0 0.0
  %1577 = vmatprep.subr.mxu0 0.0
  %1578 = vmatpush1.msra.mxu0 0.0
  %1579 = vmatprep.subr.mxu0 0.0
  %1580 = vmatpush1.msra.mxu0 0.0
  %1581 = vmatprep.subr.mxu0 0.0
  %1582 = vmatpush1.msra.mxu0 0.0
  %1583 = vmatprep.subr.mxu0 0.0
  %1584 = vmatpush1.msra.mxu0 0.0
  %1585 = vmatprep.subr.mxu0 0.0
  %1586 = vmatpush1.msra.mxu0 0.0
  %1587 = vmatprep.subr.mxu0 0.0
  %1588 = vmatpush1.msra.mxu0 0.0
  %1589 = vmatprep.subr.mxu0 0.0
  %1590 = vmatpush1.msra.mxu0 0.0
  %1591 = vmatprep.subr.mxu0 0.0
  %1592 = vmatpush1.msra.mxu0 0.0
  %1593 = vmatprep.subr.mxu0 0.0
  %1594 = vmatpush1.msra.mxu0 0.0
  %1595 = vmatprep.subr.mxu0 0.0
  %1596 = vmatpush1.msra.mxu0 0.0
  %1597 = vmatprep.subr.mxu0 0.0
  %1598 = vmatpush1.msra.mxu0 0.0
  %1599 = vmatprep.subr.mxu0 0.0
  %1600 = vmatpush1.msra.mxu0 0.0
  %1601 = vmatprep.subr.mxu0 0.0
  %1602 = vmatpush1.msra.mxu0 0.0
  %1603 = vmatprep.subr.mxu0 0.0
  %1604 = vmatpush1.msra.mxu0 0.0
  %1605 = vmatprep.subr.mxu0 0.0
  %1606 = vmatpush1.msra.mxu0 0.0
  %1607 = vmatprep.subr.mxu0 0.0
  %1608 = vmatpush1.msra.mxu0 0.0
  %1609 = vmatprep.subr.mxu0 0.0
  %1610 = vmatpush1.msra.mxu0 0.0
  %1611 = vmatprep.subr.mxu0 0.0
  %1612 = vmatpush1.msra.mxu0 0.0
  %1613 = vmatprep.subr.mxu0 0.0
  %1614 = vmatpush1.msra.mxu0 0.0
  %1615 = vmatprep.subr.mxu0 0.0
  %1616 = vmatpush1.msra.mxu0 0.0
  %1617 = vmatprep.subr.mxu0 0.0
  %1618 = vmatpush1.msra.mxu0 0.0
  %1619 = vmatprep.subr.mxu0 0.0
  %1620 = vmatpush1.msra.mxu0 0.0
  %1621 = vmatprep.subr.mxu0 0.0
  %1622 = vmatpush1.msra.mxu0 0.0
  %1623 = vmatprep.subr.mxu0 0.0
  %1624 = vmatpush1.msra.mxu0 0.0
  %1625 = vmatprep.mubr.f32.mxu0 0.0
  %1626 = vmatmul.mubr.f32.gmra.mrb[0].mxu0 %v1559
  %v1627 = vpop.f32.mrb[0].mxu0
  %v1628 = vadd.f32 %v528, %v1627
  %v1629 = vpop.f32.mrb[0].mxu0
  %1630 = vdwg.mxu0
  %1631 = vst [vmem:[%s8 + $0x30] sm:$0xff] %v1628
  %1632 = vmatprep.subr.mxu0 0.0
  %1633 = vmatpush1.msra.mxu0 %v413
  %1634 = vmatprep.subr.mxu0 0.0
  %1635 = vmatpush1.msra.mxu0 %v414
  %1636 = vmatprep.subr.mxu0 0.0
  %1637 = vmatpush1.msra.mxu0 %v415
  %1638 = vmatprep.subr.mxu0 0.0
  %1639 = vmatpush1.msra.mxu0 %v416
  %1640 = vmatprep.subr.mxu0 0.0
  %1641 = vmatpush1.msra.mxu0 0.0
  %1642 = vmatprep.subr.mxu0 0.0
  %1643 = vmatpush1.msra.mxu0 0.0
  %1644 = vmatprep.subr.mxu0 0.0
  %1645 = vmatpush1.msra.mxu0 0.0
  %1646 = vmatprep.subr.mxu0 0.0
  %1647 = vmatpush1.msra.mxu0 0.0
  %1648 = vmatprep.subr.mxu0 0.0
  %1649 = vmatpush1.msra.mxu0 0.0
  %1650 = vmatprep.subr.mxu0 0.0
  %1651 = vmatpush1.msra.mxu0 0.0
  %1652 = vmatprep.subr.mxu0 0.0
  %1653 = vmatpush1.msra.mxu0 0.0
  %1654 = vmatprep.subr.mxu0 0.0
  %1655 = vmatpush1.msra.mxu0 0.0
  %1656 = vmatprep.subr.mxu0 0.0
  %1657 = vmatpush1.msra.mxu0 0.0
  %1658 = vmatprep.subr.mxu0 0.0
  %1659 = vmatpush1.msra.mxu0 0.0
  %1660 = vmatprep.subr.mxu0 0.0
  %1661 = vmatpush1.msra.mxu0 0.0
  %1662 = vmatprep.subr.mxu0 0.0
  %1663 = vmatpush1.msra.mxu0 0.0
  %1664 = vmatprep.subr.mxu0 0.0
  %1665 = vmatpush1.msra.mxu0 0.0
  %1666 = vmatprep.subr.mxu0 0.0
  %1667 = vmatpush1.msra.mxu0 0.0
  %1668 = vmatprep.subr.mxu0 0.0
  %1669 = vmatpush1.msra.mxu0 0.0
  %1670 = vmatprep.subr.mxu0 0.0
  %1671 = vmatpush1.msra.mxu0 0.0
  %1672 = vmatprep.subr.mxu0 0.0
  %1673 = vmatpush1.msra.mxu0 0.0
  %1674 = vmatprep.subr.mxu0 0.0
  %1675 = vmatpush1.msra.mxu0 0.0
  %1676 = vmatprep.subr.mxu0 0.0
  %1677 = vmatpush1.msra.mxu0 0.0
  %1678 = vmatprep.subr.mxu0 0.0
  %1679 = vmatpush1.msra.mxu0 0.0
  %1680 = vmatprep.subr.mxu0 0.0
  %1681 = vmatpush1.msra.mxu0 0.0
  %1682 = vmatprep.subr.mxu0 0.0
  %1683 = vmatpush1.msra.mxu0 0.0
  %1684 = vmatprep.subr.mxu0 0.0
  %1685 = vmatpush1.msra.mxu0 0.0
  %1686 = vmatprep.subr.mxu0 0.0
  %1687 = vmatpush1.msra.mxu0 0.0
  %1688 = vmatprep.subr.mxu0 0.0
  %1689 = vmatpush1.msra.mxu0 0.0
  %1690 = vmatprep.subr.mxu0 0.0
  %1691 = vmatpush1.msra.mxu0 0.0
  %1692 = vmatprep.subr.mxu0 0.0
  %1693 = vmatpush1.msra.mxu0 0.0
  %1694 = vmatprep.subr.mxu0 0.0
  %1695 = vmatpush1.msra.mxu0 0.0
  %1696 = vmatprep.mubr.f32.mxu0 0.0
  %1697 = vmatmul.mubr.f32.gmra.mrb[0].mxu0 %v1559
  %v1698 = vpop.f32.mrb[0].mxu0
  %v1699 = vadd.f32 0.0, %v1698
  %v1700 = vpop.f32.mrb[0].mxu0
  %1701 = vdwg.mxu0
  %v1702 = vadd.f32 %v410, %v1699
  %v1703 = vxor.u32 %v1702, 2147483648
  %v1704 = vmul.f32 %v1703, 1.442695
  %v1705 = vpow.pop %v1704
  %v1706 = vadd.f32 %v1705, 1.0
  %v1707 = vrcp.pop %v1706
  %v1708 = vmul.f32 1.0, %v1707
  %v1709 = vtanh.pop %v1702
  %v1710 = vmul.f32 %v1708, %v1549
  %1712 = vrot.lane.b32.xlu0 %v1709, 64
  %v1713 = vpop.permute.xlu0 %1712
  %v1715 = vmul.f32 %v1708, %v1713
  %1717 = vrot.lane.b32.xlu0 %v1715, 32
  %v1718 = vpop.permute.xlu0 %1717
  %v1720 = vadd.f32 %v1710, %v1718
  %v1721 = vtanh.pop %v1720
  %1723 = vrot.lane.b32.xlu0 %v1721, 64
  %v1724 = vpop.permute.xlu0 %1723
  %v1726 = vmul.f32 %v1708, %v1724
  %1728 = vrot.lane.b32.xlu0 %v1726, 32
  %v1729 = vpop.permute.xlu0 %1728
  %v1730 = vsel %vm56, %v1729, 0
  %1732 = vmatprep.subr.mxu0 0.0
  %1733 = vmatpush1.msra.mxu0 %v417
  %1734 = vmatprep.subr.mxu0 0.0
  %1735 = vmatpush1.msra.mxu0 %v418
  %1736 = vmatprep.subr.mxu0 0.0
  %1737 = vmatpush1.msra.mxu0 %v419
  %1738 = vmatprep.subr.mxu0 0.0
  %1739 = vmatpush1.msra.mxu0 %v420
  %1740 = vmatprep.subr.mxu0 0.0
  %1741 = vmatpush1.msra.mxu0 0.0
  %1742 = vmatprep.subr.mxu0 0.0
  %1743 = vmatpush1.msra.mxu0 0.0
  %1744 = vmatprep.subr.mxu0 0.0
  %1745 = vmatpush1.msra.mxu0 0.0
  %1746 = vmatprep.subr.mxu0 0.0
  %1747 = vmatpush1.msra.mxu0 0.0
  %1748 = vmatprep.subr.mxu0 0.0
  %1749 = vmatpush1.msra.mxu0 0.0
  %1750 = vmatprep.subr.mxu0 0.0
  %1751 = vmatpush1.msra.mxu0 0.0
  %1752 = vmatprep.subr.mxu0 0.0
  %1753 = vmatpush1.msra.mxu0 0.0
  %1754 = vmatprep.subr.mxu0 0.0
  %1755 = vmatpush1.msra.mxu0 0.0
  %1756 = vmatprep.subr.mxu0 0.0
  %1757 = vmatpush1.msra.mxu0 0.0
  %1758 = vmatprep.subr.mxu0 0.0
  %1759 = vmatpush1.msra.mxu0 0.0
  %1760 = vmatprep.subr.mxu0 0.0
  %1761 = vmatpush1.msra.mxu0 0.0
  %1762 = vmatprep.subr.mxu0 0.0
  %1763 = vmatpush1.msra.mxu0 0.0
  %1764 = vmatprep.subr.mxu0 0.0
  %1765 = vmatpush1.msra.mxu0 0.0
  %1766 = vmatprep.subr.mxu0 0.0
  %1767 = vmatpush1.msra.mxu0 0.0
  %1768 = vmatprep.subr.mxu0 0.0
  %1769 = vmatpush1.msra.mxu0 0.0
  %1770 = vmatprep.subr.mxu0 0.0
  %1771 = vmatpush1.msra.mxu0 0.0
  %1772 = vmatprep.subr.mxu0 0.0
  %1773 = vmatpush1.msra.mxu0 0.0
  %1774 = vmatprep.subr.mxu0 0.0
  %1775 = vmatpush1.msra.mxu0 0.0
  %1776 = vmatprep.subr.mxu0 0.0
  %1777 = vmatpush1.msra.mxu0 0.0
  %1778 = vmatprep.subr.mxu0 0.0
  %1779 = vmatpush1.msra.mxu0 0.0
  %1780 = vmatprep.subr.mxu0 0.0
  %1781 = vmatpush1.msra.mxu0 0.0
  %1782 = vmatprep.subr.mxu0 0.0
  %1783 = vmatpush1.msra.mxu0 0.0
  %1784 = vmatprep.subr.mxu0 0.0
  %1785 = vmatpush1.msra.mxu0 0.0
  %1786 = vmatprep.subr.mxu0 0.0
  %1787 = vmatpush1.msra.mxu0 0.0
  %1788 = vmatprep.subr.mxu0 0.0
  %1789 = vmatpush1.msra.mxu0 0.0
  %1790 = vmatprep.subr.mxu0 0.0
  %1791 = vmatpush1.msra.mxu0 0.0
  %1792 = vmatprep.subr.mxu0 0.0
  %1793 = vmatpush1.msra.mxu0 0.0
  %1794 = vmatprep.subr.mxu0 0.0
  %1795 = vmatpush1.msra.mxu0 0.0
  %1796 = vmatprep.mubr.f32.mxu0 0.0
  %1797 = vmatmul.mubr.f32.gmra.mrb[0].mxu0 %v1730
  %v1798 = vpop.f32.mrb[0].mxu0
  %v1799 = vadd.f32 %v528, %v1798
  %v1800 = vpop.f32.mrb[0].mxu0
  %1801 = vdwg.mxu0
  %1802 = vst [vmem:[%s8 + $0x38] sm:$0xff] %v1799
  // Predicated region
  $region34: #{decoder_forward.1} parent=0 // pred_check
    _
  $region35: #{decoder_forward.1} parent=0 // pred_check_branch
    %1804 = sbr.rel (0) target = $region37
  $region36: #{decoder_forward.1} parent=0 // pred_region
    _
  $region37: #{decoder_forward.1} parent=0 // pred_fallthru
    _
  // Predicated region
  $region38: #{decoder_forward.1} parent=0 // pred_check
    _
  $region39: #{decoder_forward.1} parent=0 // pred_check_branch
    %1806 = sbr.rel (0) target = $region41
  $region40: #{decoder_forward.1} parent=0 // pred_region
    _
  $region41: #{decoder_forward.1} parent=0 // pred_fallthru
    _

</llo_original>
